<compile_context>
chip_gen: v6e
topology: v6e:2x2x1
jax: 0.10.0
libtpu: 0.0.40
codegen_flags: <defaults>
</compile_context>

<pallas_src>
import jax
import jax.numpy as jnp
from jax import lax
from jax.experimental import pallas as pl
from jax.experimental.pallas import tpu as pltpu

# ---------------- synthetic config (small) ----------------
HIDDEN = 32           # config.hidden_size
VOCAB = 100           # config.vocab_size
MAX_POS = 64          # config.max_position_embeddings
TYPE_VOCAB = 2        # config.type_vocab_size
LN_EPS = 1e-12        # config.layer_norm_eps
# config.hidden_dropout_prob -> dropout is identity here (eval / p=0)

MAX_WORDLEN = 8       # mu_conf.max_wordlen
CHAR_VOCAB = 30       # len(mu_conf.char_dict)
CHAR_EMB_DIM = 16     # mu_conf.char_input_dim
AUG_DIM = 16          # mu_conf.aug_dim
CONV_K = 3            # char_cnn conv kernel width (assumed), 'same' padding

TM_MAX = 512          # tokens per grid step (big tiles amortize ~0.35us/step overhead)


def _round_up(x, m):
    return (x + m - 1) // m * m


# ---------------- Pallas kernel (fused hot path) ----------------
def _make_kernel(seq_len):
    def kernel(wt_ref, cidl_ref, cidc_ref, cidr_ref, aug_ref,
               pos_emb_ref, tconv_ref, w1_ref, w2_ref, waug_ref, const_ref,
               out_ref):
        tm, L = cidl_ref.shape
        H = out_ref.shape[-1]
        CVP = tconv_ref.shape[1]
        MAXPOS = pos_emb_ref.shape[0]
        R = tm * L

        # packed tiny parameters: rows = [bconv, bcat, baug, gamma, beta, 0, 0, 0]
        bconv = const_ref[0:1, :]
        bcat = const_ref[1:2, :]
        baug = const_ref[2:3, :]
        gamma = const_ref[3:4, :]
        beta = const_ref[4:5, :]

        # ---- word+type (pre-gathered & fused) + position embedding ----
        # positions derived from the grid position: pos = global_row % seq_len,
        # gathered via one-hot matmul against the resident (MAX_POS, H) table.
        row0 = pl.program_id(0) * tm
        pos = (row0 + lax.broadcasted_iota(jnp.int32, (tm, 1), 0)) % seq_len
        pos_oh = (pos == lax.broadcasted_iota(jnp.int32, (tm, MAXPOS), 1)
                  ).astype(jnp.float32)
        e = wt_ref[...] + jnp.dot(pos_oh, pos_emb_ref[...],
                                  preferred_element_type=jnp.float32)         # (tm, H)

        # ---- char CNN: k=3 'same' conv as 3 one-hot-gathered table matmuls ----
        # tconv[j] = char_emb @ W_j (folded in the wrapper; exact for a one-hot gather).
        # Boundary positions carry sentinel id -1 -> all-zero one-hot -> zero padding.
        acc = None
        for j, cid_ref in enumerate((cidl_ref, cidc_ref, cidr_ref)):
            oh = (cid_ref[...][:, :, None]
                  == lax.broadcasted_iota(jnp.int32, (tm, L, CVP), 2)
                  ).astype(jnp.float32)                                       # (tm, L, CVP)
            d = jnp.dot(oh.reshape(R, CVP), tconv_ref[j],
                        preferred_element_type=jnp.float32)                   # (R, H)
            acc = d if acc is None else acc + d
        conv = jnp.maximum(acc + bconv, 0.0)
        char_feat = jnp.max(conv.reshape(tm, L, H), axis=1)                   # (tm, H)

        # ---- char_cnn_linear (concat split into two dots) + aug_linear ----
        x = (jnp.dot(e, w1_ref[...], preferred_element_type=jnp.float32)
             + jnp.dot(char_feat, w2_ref[...], preferred_element_type=jnp.float32)
             + bcat
             + jnp.dot(aug_ref[...], waug_ref[...], preferred_element_type=jnp.float32)
             + baug)

        # ---- LayerNorm over hidden dim (single fused pass: E[x], E[x^2]) ----
        mu = jnp.mean(x, axis=-1, keepdims=True)
        var = jnp.mean(x * x, axis=-1, keepdims=True) - mu * mu
        y = (x - mu) * lax.rsqrt(var + LN_EPS) * gamma + beta
        out_ref[...] = y.astype(out_ref.dtype)

    return kernel


# ---------------- wrapper ----------------
def bert_embeddings_pallas(params, char_input_ids, sent_token_aug, input_ids,
                           token_type_ids=None):
    B, S = input_ids.shape
    H = HIDDEN
    L = MAX_WORDLEN
    N = B * S
    assert S <= MAX_POS, "sequence length exceeds max_position_embeddings"
    if token_type_ids is None:
        token_type_ids = jnp.zeros_like(input_ids)

    # --- glue: fused word + token_type gather (one (N, H) stream instead of three) ---
    wt = (params["word_emb"][input_ids.reshape(-1)]
          + params["type_emb"][token_type_ids.reshape(-1)]).astype(jnp.float32)

    # --- glue: k=3 'same' conv windows as three shifted int32 id tensors ---
    cid = char_input_ids.reshape(N, L).astype(jnp.int32)
    minus1 = jnp.full((N, 1), -1, jnp.int32)                 # sentinel -> zero contribution
    cid_l = jnp.concatenate([minus1, cid[:, :-1]], axis=1)   # char at l-1
    cid_c = cid                                              # char at l
    cid_r = jnp.concatenate([cid[:, 1:], minus1], axis=1)    # char at l+1

    aug = sent_token_aug.reshape(N, AUG_DIM).astype(jnp.float32)

    # --- row tiling: big tiles, pad the tail (no divisibility assert) ---
    tm = min(TM_MAX, _round_up(N, 8))
    n_pad = _round_up(N, tm)
    pad = n_pad - N
    if pad:
        wt = jnp.pad(wt, ((0, pad), (0, 0)))
        cid_l = jnp.pad(cid_l, ((0, pad), (0, 0)), constant_values=-1)
        cid_c = jnp.pad(cid_c, ((0, pad), (0, 0)), constant_values=-1)
        cid_r = jnp.pad(cid_r, ((0, pad), (0, 0)), constant_values=-1)
        aug = jnp.pad(aug, ((0, pad), (0, 0)))

    # --- fold the char-embedding table into the conv weights: T_j = char_emb @ W_j ---
    # (bit-exact under a one-hot gather: selecting one row then matmul == matmul then select)
    CVP = _round_up(CHAR_VOCAB, 8)
    char_emb_p = jnp.zeros((CVP, CHAR_EMB_DIM), jnp.float32
                           ).at[:CHAR_VOCAB].set(params["char_emb"])
    wconv3 = params["wconv"].reshape(CONV_K, CHAR_EMB_DIM, H)     # [W_left, W_center, W_right]
    tconv = jnp.einsum("cd,jdh->jch", char_emb_p, wconv3)         # (3, CVP, H)

    # --- pack the five tiny (1, H) params into one (8, H) constant block ---
    consts = jnp.concatenate([params["bconv"], params["bcat"], params["baug"],
                              params["gamma"], params["beta"],
                              jnp.zeros((3, H), jnp.float32)], axis=0)

    n_steps = n_pad // tm
    row2 = lambda i: (i, 0)
    const2 = lambda i: (0, 0)
    const3 = lambda i: (0, 0, 0)

    out = pl.pallas_call(
        _make_kernel(S),
        out_shape=jax.ShapeDtypeStruct((n_pad, H), jnp.float32),
        grid_spec=pltpu.PrefetchScalarGridSpec(
            num_scalar_prefetch=0,
            grid=(n_steps,),
            in_specs=[
                pl.BlockSpec((tm, H), row2),                 # fused word+type rows
                pl.BlockSpec((tm, L), row2),                 # char ids, left-shifted
                pl.BlockSpec((tm, L), row2),                 # char ids, center
                pl.BlockSpec((tm, L), row2),                 # char ids, right-shifted
                pl.BlockSpec((tm, AUG_DIM), row2),           # aug features
                pl.BlockSpec((MAX_POS, H), const2),          # position table (resident)
                pl.BlockSpec((CONV_K, CVP, H), const3),      # folded char->conv tables
                pl.BlockSpec((H, H), const2),                # char_cnn_linear W (emb half)
                pl.BlockSpec((H, H), const2),                # char_cnn_linear W (char half)
                pl.BlockSpec((AUG_DIM, H), const2),          # aug_linear W
                pl.BlockSpec((8, H), const2),                # packed biases / LN params
            ],
            out_specs=pl.BlockSpec((tm, H), row2),
        ),
        compiler_params=pltpu.CompilerParams(
            dimension_semantics=("parallel",),
            vmem_limit_bytes=48 * 1024 * 1024,
        ),
    )(wt, cid_l, cid_c, cid_r, aug,
      params["pos_emb"], tconv,
      params["w1"], params["w2"], params["waug"], consts)

    return out[:N].reshape(B, S, H)


# ---------------- plain-JAX reference (for a sanity check) ----------------
def bert_embeddings_ref(params, char_input_ids, sent_token_aug, input_ids,
                        token_type_ids=None):
    B, S = input_ids.shape
    if token_type_ids is None:
        token_type_ids = jnp.zeros_like(input_ids)
    position_ids = jnp.broadcast_to(jnp.arange(S, dtype=jnp.int32)[None, :], (B, S))

    we = params["word_emb"][input_ids]
    pe = params["pos_emb"][position_ids]
    te = params["type_emb"][token_type_ids]

    ch = params["char_emb"][char_input_ids]                              # (B,S,L,Cd)
    chp = jnp.pad(ch, ((0, 0), (0, 0), (1, 1), (0, 0)))
    chu = jnp.concatenate([chp[:, :, l:l + MAX_WORDLEN, :] for l in range(CONV_K)],
                          axis=-1)                                       # (B,S,L,3Cd)
    conv = jnp.maximum(jnp.einsum("bslk,kh->bslh", chu, params["wconv"])
                       + params["bconv"][0], 0.0)
    char_feat = jnp.max(conv, axis=2)                                    # (B,S,H)

    e = we + pe + te
    x = (e @ params["w1"] + char_feat @ params["w2"] + params["bcat"][0])
    x = x + sent_token_aug @ params["waug"] + params["baug"][0]
    mu = jnp.mean(x, axis=-1, keepdims=True)
    var = jnp.mean(jnp.square(x - mu), axis=-1, keepdims=True)
    return (x - mu) / jnp.sqrt(var + LN_EPS) * params["gamma"][0] + params["beta"][0]


# ---------------- deterministic parameter init ----------------
def init_params(key):
    ks = jax.random.split(key, 12)
    H = HIDDEN
    K = CONV_K * CHAR_EMB_DIM
    p = {
        "word_emb": 0.02 * jax.random.normal(ks[0], (VOCAB, H), jnp.float32),
        "pos_emb":  0.02 * jax.random.normal(ks[1], (MAX_POS, H), jnp.float32),
        "type_emb": 0.02 * jax.random.normal(ks[2], (TYPE_VOCAB, H), jnp.float32),
        "char_emb": 0.02 * jax.random.normal(ks[3], (CHAR_VOCAB, CHAR_EMB_DIM), jnp.float32),
        "wconv": 0.05 * jax.random.normal(ks[4], (K, H), jnp.float32),
        "bconv": 0.01 * jax.random.normal(ks[5], (1, H), jnp.float32),
        "w1":    0.05 * jax.random.normal(ks[6], (H, H), jnp.float32),
        "w2":    0.05 * jax.random.normal(ks[7], (H, H), jnp.float32),
        "bcat":  0.01 * jax.random.normal(ks[8], (1, H), jnp.float32),
        "waug":  0.05 * jax.random.normal(ks[9], (AUG_DIM, H), jnp.float32),
        "baug":  0.01 * jax.random.normal(ks[10], (1, H), jnp.float32),
        "gamma": jnp.ones((1, H), jnp.float32),
        "beta":  jnp.zeros((1, H), jnp.float32),
    }
    # nn.Embedding padding_idx=0 -> row 0 is zero
    p["word_emb"] = p["word_emb"].at[0].set(0.0)
    p["char_emb"] = p["char_emb"].at[0].set(0.0)
    return p


if __name__ == "__main__":
    key = jax.random.PRNGKey(0)
    kp, k1, k2, k3, k4 = jax.random.split(key, 5)

    B, S = 2, 8
    params = init_params(kp)
    input_ids = jax.random.randint(k1, (B, S), 0, VOCAB, dtype=jnp.int32)
    token_type_ids = jax.random.randint(k2, (B, S), 0, TYPE_VOCAB, dtype=jnp.int32)
    char_input_ids = jax.random.randint(k3, (B, S, MAX_WORDLEN), 0, CHAR_VOCAB,
                                        dtype=jnp.int32)
    sent_token_aug = jax.random.normal(k4, (B, S, AUG_DIM), jnp.float32)

    out = bert_embeddings_pallas(params, char_input_ids, sent_token_aug,
                                 input_ids, token_type_ids)
    out = jax.block_until_ready(out)

    ref = bert_embeddings_ref(params, char_input_ids, sent_token_aug,
                              input_ids, token_type_ids)
    assert out.shape == (B, S, HIDDEN)
    assert jnp.allclose(out, ref, atol=1e-4, rtol=1e-4), "mismatch vs JAX reference"

    print("KERNEL_OK")
</pallas_src>

<mosaic_0001>
module attributes {stable_mosaic.version = 11 : i64} {
  func.func @kernel(%arg0: i32, %arg1: memref<16x32xf32, #tpu.memory_space<vmem>>, %arg2: memref<16x8xi32, #tpu.memory_space<vmem>>, %arg3: memref<16x8xi32, #tpu.memory_space<vmem>>, %arg4: memref<16x8xi32, #tpu.memory_space<vmem>>, %arg5: memref<16x16xf32, #tpu.memory_space<vmem>>, %arg6: memref<64x32xf32, #tpu.memory_space<vmem>>, %arg7: memref<3x32x32xf32, #tpu.memory_space<vmem>>, %arg8: memref<32x32xf32, #tpu.memory_space<vmem>>, %arg9: memref<32x32xf32, #tpu.memory_space<vmem>>, %arg10: memref<16x32xf32, #tpu.memory_space<vmem>>, %arg11: memref<8x32xf32, #tpu.memory_space<vmem>>, %arg12: memref<16x32xf32, #tpu.memory_space<vmem>>) attributes {dimension_semantics = [#tpu.dimension_semantics<parallel>], iteration_bounds = array<i64: 1>, scalar_prefetch = 0 : i64, scratch_operands = 0 : i64, tpu.core_type = #tpu.core_type<tc>, window_params = [{transform_indices = @transform_0, window_bounds = array<i64: 16, 32>}, {transform_indices = @transform_1, window_bounds = array<i64: 16, 8>}, {transform_indices = @transform_2, window_bounds = array<i64: 16, 8>}, {transform_indices = @transform_3, window_bounds = array<i64: 16, 8>}, {transform_indices = @transform_4, window_bounds = array<i64: 16, 16>}, {pipeline_mode = #tpu.pipeline_mode<synchronous>, transform_indices = @transform_5, window_bounds = array<i64: 64, 32>}, {pipeline_mode = #tpu.pipeline_mode<synchronous>, transform_indices = @transform_6, window_bounds = array<i64: 3, 32, 32>}, {pipeline_mode = #tpu.pipeline_mode<synchronous>, transform_indices = @transform_7, window_bounds = array<i64: 32, 32>}, {pipeline_mode = #tpu.pipeline_mode<synchronous>, transform_indices = @transform_8, window_bounds = array<i64: 32, 32>}, {pipeline_mode = #tpu.pipeline_mode<synchronous>, transform_indices = @transform_9, window_bounds = array<i64: 16, 32>}, {pipeline_mode = #tpu.pipeline_mode<synchronous>, transform_indices = @transform_10, window_bounds = array<i64: 8, 32>}, {transform_indices = @transform_11, window_bounds = array<i64: 16, 32>}]} {
    %c0 = arith.constant 0 : index
    %c0_0 = arith.constant 0 : index
    %0 = vector.load %arg11[%c0, %c0_0] : memref<8x32xf32, #tpu.memory_space<vmem>>, vector<1x32xf32>
    %c1 = arith.constant 1 : index
    %c0_1 = arith.constant 0 : index
    %1 = vector.load %arg11[%c1, %c0_1] : memref<8x32xf32, #tpu.memory_space<vmem>>, vector<1x32xf32>
    %c2 = arith.constant 2 : index
    %c0_2 = arith.constant 0 : index
    %2 = vector.load %arg11[%c2, %c0_2] : memref<8x32xf32, #tpu.memory_space<vmem>>, vector<1x32xf32>
    %c3 = arith.constant 3 : index
    %c0_3 = arith.constant 0 : index
    %3 = vector.load %arg11[%c3, %c0_3] : memref<8x32xf32, #tpu.memory_space<vmem>>, vector<1x32xf32>
    %c4 = arith.constant 4 : index
    %c0_4 = arith.constant 0 : index
    %4 = vector.load %arg11[%c4, %c0_4] : memref<8x32xf32, #tpu.memory_space<vmem>>, vector<1x32xf32>
    %c16_i32 = arith.constant 16 : i32
    %5 = arith.muli %arg0, %c16_i32 : i32
    %6 = tpu.iota {dimensions = array<i32: 0>} : vector<16x1xi32>
    %7 = vector.broadcast %5 : i32 to vector<16x1xi32>
    %8 = arith.addi %7, %6 : vector<16x1xi32>
    %c8_i32 = arith.constant 8 : i32
    %c0_i32 = arith.constant 0 : i32
    %9 = arith.cmpi eq, %c8_i32, %c0_i32 : i32
    %c1_i32 = arith.constant 1 : i32
    %10 = arith.select %9, %c1_i32, %c8_i32 : i32
    %11 = vector.broadcast %10 : i32 to vector<16x1xi32>
    %12 = arith.remsi %8, %11 : vector<16x1xi32>
    %c0_i32_5 = arith.constant 0 : i32
    %13 = vector.broadcast %c0_i32_5 : i32 to vector<16x1xi32>
    %14 = arith.cmpi ne, %12, %13 : vector<16x1xi32>
    %c0_i32_6 = arith.constant 0 : i32
    %15 = vector.broadcast %c0_i32_6 : i32 to vector<16x1xi32>
    %16 = arith.cmpi slt, %12, %15 : vector<16x1xi32>
    %c0_i32_7 = arith.constant 0 : i32
    %17 = arith.cmpi slt, %10, %c0_i32_7 : i32
    %18 = vector.broadcast %17 : i1 to vector<16x1xi1>
    %19 = vector.broadcast %18 : vector<16x1xi1> to vector<16x1xi1>
    %20 = arith.xori %16, %19 : vector<16x1xi1>
    %21 = arith.andi %20, %14 : vector<16x1xi1>
    %22 = vector.broadcast %10 : i32 to vector<16x1xi32>
    %23 = arith.addi %12, %22 : vector<16x1xi32>
    %24 = arith.select %21, %23, %12 : vector<16x1xi1>, vector<16x1xi32>
    %25 = tpu.iota {dimensions = array<i32: 1>} : vector<16x64xi32>
    %26 = vector.broadcast %24 : vector<16x1xi32> to vector<16x64xi32>
    %27 = arith.cmpi eq, %26, %25 : vector<16x64xi32>
    %28 = arith.extui %27 : vector<16x64xi1> to vector<16x64xi32>
    %29 = arith.sitofp %28 : vector<16x64xi32> to vector<16x64xf32>
    %c0_8 = arith.constant 0 : index
    %c0_9 = arith.constant 0 : index
    %30 = vector.load %arg1[%c0_8, %c0_9] : memref<16x32xf32, #tpu.memory_space<vmem>>, vector<16x32xf32>
    %c0_10 = arith.constant 0 : index
    %c0_11 = arith.constant 0 : index
    %31 = vector.load %arg6[%c0_10, %c0_11] : memref<64x32xf32, #tpu.memory_space<vmem>>, vector<64x32xf32>
    %cst = arith.constant dense<0.000000e+00> : vector<16x32xf32>
    %32 = tpu.matmul %29, %31, %cst {dimension_numbers = #tpu.dot_dimension_numbers<[1], [0], [0], [1], [0, 0, 1, 1], [], []>} : vector<16x64xf32>, vector<64x32xf32>, vector<16x32xf32> -> vector<16x32xf32>
    %33 = arith.addf %30, %32 : vector<16x32xf32>
    %c0_12 = arith.constant 0 : index
    %c0_13 = arith.constant 0 : index
    %34 = vector.load %arg2[%c0_12, %c0_13] : memref<16x8xi32, #tpu.memory_space<vmem>>, vector<16x8xi32>
    %35 = vector.shape_cast %34 : vector<16x8xi32> to vector<16x8x1xi32>
    %36 = tpu.iota {dimensions = array<i32: 2>} : vector<16x8x32xi32>
    %37 = vector.broadcast %35 : vector<16x8x1xi32> to vector<16x8x32xi32>
    %38 = arith.cmpi eq, %37, %36 : vector<16x8x32xi32>
    %39 = arith.extui %38 : vector<16x8x32xi1> to vector<16x8x32xi32>
    %40 = arith.sitofp %39 : vector<16x8x32xi32> to vector<16x8x32xf32>
    %41 = vector.shape_cast %40 : vector<16x8x32xf32> to vector<128x32xf32>
    %c0_14 = arith.constant 0 : index
    %c0_15 = arith.constant 0 : index
    %c0_16 = arith.constant 0 : index
    %42 = vector.load %arg7[%c0_14, %c0_15, %c0_16] : memref<3x32x32xf32, #tpu.memory_space<vmem>>, vector<1x32x32xf32>
    %43 = vector.shape_cast %42 : vector<1x32x32xf32> to vector<32x32xf32>
    %cst_17 = arith.constant dense<0.000000e+00> : vector<128x32xf32>
    %44 = tpu.matmul %41, %43, %cst_17 {dimension_numbers = #tpu.dot_dimension_numbers<[1], [0], [0], [1], [0, 0, 1, 1], [], []>} : vector<128x32xf32>, vector<32x32xf32>, vector<128x32xf32> -> vector<128x32xf32>
    %c0_18 = arith.constant 0 : index
    %c0_19 = arith.constant 0 : index
    %45 = vector.load %arg3[%c0_18, %c0_19] : memref<16x8xi32, #tpu.memory_space<vmem>>, vector<16x8xi32>
    %46 = vector.shape_cast %45 : vector<16x8xi32> to vector<16x8x1xi32>
    %47 = tpu.iota {dimensions = array<i32: 2>} : vector<16x8x32xi32>
    %48 = vector.broadcast %46 : vector<16x8x1xi32> to vector<16x8x32xi32>
    %49 = arith.cmpi eq, %48, %47 : vector<16x8x32xi32>
    %50 = arith.extui %49 : vector<16x8x32xi1> to vector<16x8x32xi32>
    %51 = arith.sitofp %50 : vector<16x8x32xi32> to vector<16x8x32xf32>
    %52 = vector.shape_cast %51 : vector<16x8x32xf32> to vector<128x32xf32>
    %c1_20 = arith.constant 1 : index
    %c0_21 = arith.constant 0 : index
    %c0_22 = arith.constant 0 : index
    %53 = vector.load %arg7[%c1_20, %c0_21, %c0_22] : memref<3x32x32xf32, #tpu.memory_space<vmem>>, vector<1x32x32xf32>
    %54 = vector.shape_cast %53 : vector<1x32x32xf32> to vector<32x32xf32>
    %cst_23 = arith.constant dense<0.000000e+00> : vector<128x32xf32>
    %55 = tpu.matmul %52, %54, %cst_23 {dimension_numbers = #tpu.dot_dimension_numbers<[1], [0], [0], [1], [0, 0, 1, 1], [], []>} : vector<128x32xf32>, vector<32x32xf32>, vector<128x32xf32> -> vector<128x32xf32>
    %56 = arith.addf %44, %55 : vector<128x32xf32>
    %c0_24 = arith.constant 0 : index
    %c0_25 = arith.constant 0 : index
    %57 = vector.load %arg4[%c0_24, %c0_25] : memref<16x8xi32, #tpu.memory_space<vmem>>, vector<16x8xi32>
    %58 = vector.shape_cast %57 : vector<16x8xi32> to vector<16x8x1xi32>
    %59 = tpu.iota {dimensions = array<i32: 2>} : vector<16x8x32xi32>
    %60 = vector.broadcast %58 : vector<16x8x1xi32> to vector<16x8x32xi32>
    %61 = arith.cmpi eq, %60, %59 : vector<16x8x32xi32>
    %62 = arith.extui %61 : vector<16x8x32xi1> to vector<16x8x32xi32>
    %63 = arith.sitofp %62 : vector<16x8x32xi32> to vector<16x8x32xf32>
    %64 = vector.shape_cast %63 : vector<16x8x32xf32> to vector<128x32xf32>
    %c2_26 = arith.constant 2 : index
    %c0_27 = arith.constant 0 : index
    %c0_28 = arith.constant 0 : index
    %65 = vector.load %arg7[%c2_26, %c0_27, %c0_28] : memref<3x32x32xf32, #tpu.memory_space<vmem>>, vector<1x32x32xf32>
    %66 = vector.shape_cast %65 : vector<1x32x32xf32> to vector<32x32xf32>
    %cst_29 = arith.constant dense<0.000000e+00> : vector<128x32xf32>
    %67 = tpu.matmul %64, %66, %cst_29 {dimension_numbers = #tpu.dot_dimension_numbers<[1], [0], [0], [1], [0, 0, 1, 1], [], []>} : vector<128x32xf32>, vector<32x32xf32>, vector<128x32xf32> -> vector<128x32xf32>
    %68 = arith.addf %56, %67 : vector<128x32xf32>
    %69 = vector.broadcast %0 : vector<1x32xf32> to vector<128x32xf32>
    %70 = arith.addf %68, %69 : vector<128x32xf32>
    %cst_30 = arith.constant 0.000000e+00 : f32
    %71 = vector.broadcast %cst_30 : f32 to vector<128x32xf32>
    %72 = arith.maximumf %70, %71 : vector<128x32xf32>
    %73 = vector.shape_cast %72 : vector<128x32xf32> to vector<16x8x32xf32>
    %cst_31 = arith.constant dense<0xFF800000> : vector<16x32xf32>
    %74 = vector.multi_reduction <maximumf>, %73, %cst_31 [1] : vector<16x8x32xf32> to vector<16x32xf32>
    %c0_32 = arith.constant 0 : index
    %c0_33 = arith.constant 0 : index
    %75 = vector.load %arg8[%c0_32, %c0_33] : memref<32x32xf32, #tpu.memory_space<vmem>>, vector<32x32xf32>
    %cst_34 = arith.constant dense<0.000000e+00> : vector<16x32xf32>
    %76 = tpu.matmul %33, %75, %cst_34 {dimension_numbers = #tpu.dot_dimension_numbers<[1], [0], [0], [1], [0, 0, 1, 1], [], []>} : vector<16x32xf32>, vector<32x32xf32>, vector<16x32xf32> -> vector<16x32xf32>
    %c0_35 = arith.constant 0 : index
    %c0_36 = arith.constant 0 : index
    %77 = vector.load %arg9[%c0_35, %c0_36] : memref<32x32xf32, #tpu.memory_space<vmem>>, vector<32x32xf32>
    %cst_37 = arith.constant dense<0.000000e+00> : vector<16x32xf32>
    %78 = tpu.matmul %74, %77, %cst_37 {dimension_numbers = #tpu.dot_dimension_numbers<[1], [0], [0], [1], [0, 0, 1, 1], [], []>} : vector<16x32xf32>, vector<32x32xf32>, vector<16x32xf32> -> vector<16x32xf32>
    %79 = arith.addf %76, %78 : vector<16x32xf32>
    %80 = vector.broadcast %1 : vector<1x32xf32> to vector<16x32xf32>
    %81 = arith.addf %79, %80 : vector<16x32xf32>
    %c0_38 = arith.constant 0 : index
    %c0_39 = arith.constant 0 : index
    %82 = vector.load %arg5[%c0_38, %c0_39] : memref<16x16xf32, #tpu.memory_space<vmem>>, vector<16x16xf32>
    %c0_40 = arith.constant 0 : index
    %c0_41 = arith.constant 0 : index
    %83 = vector.load %arg10[%c0_40, %c0_41] : memref<16x32xf32, #tpu.memory_space<vmem>>, vector<16x32xf32>
    %cst_42 = arith.constant dense<0.000000e+00> : vector<16x32xf32>
    %84 = tpu.matmul %82, %83, %cst_42 {dimension_numbers = #tpu.dot_dimension_numbers<[1], [0], [0], [1], [0, 0, 1, 1], [], []>} : vector<16x16xf32>, vector<16x32xf32>, vector<16x32xf32> -> vector<16x32xf32>
    %85 = arith.addf %81, %84 : vector<16x32xf32>
    %86 = vector.broadcast %2 : vector<1x32xf32> to vector<16x32xf32>
    %87 = arith.addf %85, %86 : vector<16x32xf32>
    %cst_43 = arith.constant dense<0.000000e+00> : vector<16xf32>
    %88 = vector.multi_reduction <add>, %87, %cst_43 [1] : vector<16x32xf32> to vector<16xf32>
    %89 = vector.shape_cast %88 : vector<16xf32> to vector<16x1xf32>
    %cst_44 = arith.constant 3.200000e+01 : f32
    %90 = vector.broadcast %cst_44 : f32 to vector<16x1xf32>
    %91 = arith.divf %89, %90 : vector<16x1xf32>
    %92 = arith.mulf %87, %87 : vector<16x32xf32>
    %cst_45 = arith.constant dense<0.000000e+00> : vector<16xf32>
    %93 = vector.multi_reduction <add>, %92, %cst_45 [1] : vector<16x32xf32> to vector<16xf32>
    %94 = vector.shape_cast %93 : vector<16xf32> to vector<16x1xf32>
    %cst_46 = arith.constant 3.200000e+01 : f32
    %95 = vector.broadcast %cst_46 : f32 to vector<16x1xf32>
    %96 = arith.divf %94, %95 : vector<16x1xf32>
    %97 = arith.mulf %91, %91 : vector<16x1xf32>
    %98 = arith.subf %96, %97 : vector<16x1xf32>
    %99 = vector.broadcast %91 : vector<16x1xf32> to vector<16x32xf32>
    %100 = arith.subf %87, %99 : vector<16x32xf32>
    %cst_47 = arith.constant 9.99999996E-13 : f32
    %101 = vector.broadcast %cst_47 : f32 to vector<16x1xf32>
    %102 = arith.addf %98, %101 : vector<16x1xf32>
    %103 = math.rsqrt %102 : vector<16x1xf32>
    %104 = vector.broadcast %103 : vector<16x1xf32> to vector<16x32xf32>
    %105 = arith.mulf %100, %104 : vector<16x32xf32>
    %106 = vector.broadcast %3 : vector<1x32xf32> to vector<16x32xf32>
    %107 = arith.mulf %105, %106 : vector<16x32xf32>
    %108 = vector.broadcast %4 : vector<1x32xf32> to vector<16x32xf32>
    %109 = arith.addf %107, %108 : vector<16x32xf32>
    %c0_48 = arith.constant 0 : index
    %c0_49 = arith.constant 0 : index
    %110 = vector.load %arg12[%c0_48, %c0_49] : memref<16x32xf32, #tpu.memory_space<vmem>>, vector<16x32xf32>
    tpu.vector_store %arg12[%c0_48, %c0_49], %109 {strides = array<i32>} : memref<16x32xf32, #tpu.memory_space<vmem>>, vector<16x32xf32>,
    return
  }
  func.func @transform_0(%arg0: i32) -> (i32, i32) {
    %c0_i32 = arith.constant 0 : i32
    %c0_i32_0 = arith.constant 0 : i32
    return %arg0, %c0_i32 : i32, i32
  }
  func.func @transform_1(%arg0: i32) -> (i32, i32) {
    %c0_i32 = arith.constant 0 : i32
    %c0_i32_0 = arith.constant 0 : i32
    return %arg0, %c0_i32 : i32, i32
  }
  func.func @transform_2(%arg0: i32) -> (i32, i32) {
    %c0_i32 = arith.constant 0 : i32
    %c0_i32_0 = arith.constant 0 : i32
    return %arg0, %c0_i32 : i32, i32
  }
  func.func @transform_3(%arg0: i32) -> (i32, i32) {
    %c0_i32 = arith.constant 0 : i32
    %c0_i32_0 = arith.constant 0 : i32
    return %arg0, %c0_i32 : i32, i32
  }
  func.func @transform_4(%arg0: i32) -> (i32, i32) {
    %c0_i32 = arith.constant 0 : i32
    %c0_i32_0 = arith.constant 0 : i32
    return %arg0, %c0_i32 : i32, i32
  }
  func.func @transform_5(%arg0: i32) -> (i32, i32) {
    %c0_i32 = arith.constant 0 : i32
    %c0_i32_0 = arith.constant 0 : i32
    %c0_i32_1 = arith.constant 0 : i32
    return %c0_i32, %c0_i32_0 : i32, i32
  }
  func.func @transform_6(%arg0: i32) -> (i32, i32, i32) {
    %c0_i32 = arith.constant 0 : i32
    %c0_i32_0 = arith.constant 0 : i32
    %c0_i32_1 = arith.constant 0 : i32
    %c0_i32_2 = arith.constant 0 : i32
    return %c0_i32, %c0_i32_0, %c0_i32_1 : i32, i32, i32
  }
  func.func @transform_7(%arg0: i32) -> (i32, i32) {
    %c0_i32 = arith.constant 0 : i32
    %c0_i32_0 = arith.constant 0 : i32
    %c0_i32_1 = arith.constant 0 : i32
    return %c0_i32, %c0_i32_0 : i32, i32
  }
  func.func @transform_8(%arg0: i32) -> (i32, i32) {
    %c0_i32 = arith.constant 0 : i32
    %c0_i32_0 = arith.constant 0 : i32
    %c0_i32_1 = arith.constant 0 : i32
    return %c0_i32, %c0_i32_0 : i32, i32
  }
  func.func @transform_9(%arg0: i32) -> (i32, i32) {
    %c0_i32 = arith.constant 0 : i32
    %c0_i32_0 = arith.constant 0 : i32
    %c0_i32_1 = arith.constant 0 : i32
    return %c0_i32, %c0_i32_0 : i32, i32
  }
  func.func @transform_10(%arg0: i32) -> (i32, i32) {
    %c0_i32 = arith.constant 0 : i32
    %c0_i32_0 = arith.constant 0 : i32
    %c0_i32_1 = arith.constant 0 : i32
    return %c0_i32, %c0_i32_0 : i32, i32
  }
  func.func @transform_11(%arg0: i32) -> (i32, i32) {
    %c0_i32 = arith.constant 0 : i32
    %c0_i32_0 = arith.constant 0 : i32
    return %arg0, %c0_i32 : i32, i32
  }
}

</mosaic_0001>

<llo_original>
// kernel: tpu_custom_call.1
$region0: #{tpu_custom_call.1}
  #allocation0 [shape = 'u32[]', space=smem, size = 0x4, offset = 0x4, fixed_abs, tag = 'smem constant byte address 0x4 - core index']
  #allocation1 [shape = 'u32[144,128]{1,0:T(1,128)}', space=vmem, size = 0x12000, scoped, tag = 'internal scratch']
  %s0 = inlined_call_operand.vmem [shape: f32[16,32], index: 0, kind: input, shape index: {}]
  %s1 = inlined_call_operand.vmem [shape: s32[16,8], index: 1, kind: input, shape index: {}]
  %s2 = inlined_call_operand.vmem [shape: s32[16,8], index: 2, kind: input, shape index: {}]
  %s3 = inlined_call_operand.vmem [shape: s32[16,8], index: 3, kind: input, shape index: {}]
  %s4 = inlined_call_operand.hbm [shape: f32[16,16], index: 4, kind: input, shape index: {}]
  %s5 = inlined_call_operand.vmem [shape: f32[64,32], index: 5, kind: input, shape index: {}]
  %s6 = inlined_call_operand.vmem [shape: f32[3,32,32], index: 6, kind: input, shape index: {}]
  %s7 = inlined_call_operand.vmem [shape: f32[32,32], index: 7, kind: input, shape index: {}]
  %s8 = inlined_call_operand.vmem [shape: f32[32,32], index: 8, kind: input, shape index: {}]
  %s9 = inlined_call_operand.hbm [shape: f32[16,32], index: 9, kind: input, shape index: {}]
  %s10 = inlined_call_operand.vmem [shape: f32[8,32], index: 10, kind: input, shape index: {}]
  %s11 = inlined_call_operand.hbm [shape: f32[16,32], index: 11, kind: output, shape index: {}]
  %s12 = sld [smem:[#allocation0]]
  $region62: #{tpu_custom_call.1} parent=0
    _
  %s14 = ssub.s32 1, %s12
  %s15 = scalar_select 0, %s14, %s12
  $region1: #{tpu_custom_call.1} parent=0
    #allocation2 [shape = 'u8[8192]{0}', space=vmem, size = 0x2000, scoped, tag = 'input window, operand 4, single buffered']
    #allocation3 [shape = 's32[1]{0}', space=sflag, size = 0x4, scoped, tag = 'scoped memory for tpu_custom_call.1']
    #allocation4 [shape = 's32[1]{0}', space=sflag, size = 0x4, scoped, tag = 'scoped memory for tpu_custom_call.1']
    #allocation5 [shape = 'u8[8192]{0}', space=vmem, size = 0x2000, scoped, tag = 'input window, operand 9, single buffered']
    #allocation6 [shape = 's32[1]{0}', space=sflag, size = 0x4, scoped, tag = 'scoped memory for tpu_custom_call.1']
    #allocation7 [shape = 'u8[8192]{0}', space=vmem, size = 0x2000, scoped, tag = 'output window, operand 0, single buffered']
    %16 = vsyncpa [#allocation3], 0
    %17 = vsyncpa [#allocation6], 0
    %18 = vsyncpa [#allocation4], 0
    // Predicated region
    $region2: #{tpu_custom_call.1} parent=1 // pred_check
      _
    $region3: #{tpu_custom_call.1} parent=1 // pred_check_branch
      %20 = sbr.rel (0) target = $region5
    $region4: #{tpu_custom_call.1} parent=1 // pred_region
      _
    $region5: #{tpu_custom_call.1} parent=1 // pred_fallthru
      _
    // Predicated region
    $region6: #{tpu_custom_call.1} parent=1 // pred_check
      _
    $region7: #{tpu_custom_call.1} parent=1 // pred_check_branch
      %22 = sbr.rel (0) target = $region9
    $region8: #{tpu_custom_call.1} parent=1 // pred_region
      _
    $region9: #{tpu_custom_call.1} parent=1 // pred_fallthru
      _
    // Predicated region
    $region10: #{tpu_custom_call.1} parent=1 // pred_check
      _
    $region11: #{tpu_custom_call.1} parent=1 // pred_check_branch
      %24 = sbr.rel (0) target = $region13
    $region12: #{tpu_custom_call.1} parent=1 // pred_region
      _
    $region13: #{tpu_custom_call.1} parent=1 // pred_fallthru
      _
    // Predicated region
    $region14: #{tpu_custom_call.1} parent=1 // pred_check
      _
    $region15: #{tpu_custom_call.1} parent=1 // pred_check_branch
      %26 = sbr.rel (0) target = $region17
    $region16: #{tpu_custom_call.1} parent=1 // pred_region
      _
    $region17: #{tpu_custom_call.1} parent=1 // pred_fallthru
      _
    // Predicated region
    $region18: #{tpu_custom_call.1} parent=1 // pred_check
      _
    $region19: #{tpu_custom_call.1} parent=1 // pred_check_branch
      %28 = sbr.rel (0) target = $region21
    $region20: #{tpu_custom_call.1} parent=1 // pred_region
      %s30 = ssub.s32 256, 256
      %31 = vsyncadd [#allocation3], %s30
      %s32 = sshll.u32 [#allocation2], 4
      %s33 = int_to_ptr.vmem [resolvable:$true] %s32
      %38 = dma.hbm_to_vmem [thread:$0]  %s4, 256, %s33, [#allocation3], 128, 128, 8
    $region21: #{tpu_custom_call.1} parent=1 // pred_fallthru
      _
    // Predicated region
    $region22: #{tpu_custom_call.1} parent=1 // pred_check
      _
    $region23: #{tpu_custom_call.1} parent=1 // pred_check_branch
      %40 = sbr.rel (0) target = $region25
    $region24: #{tpu_custom_call.1} parent=1 // pred_region
      _
    $region25: #{tpu_custom_call.1} parent=1 // pred_fallthru
      _
    // Predicated region
    $region26: #{tpu_custom_call.1} parent=1 // pred_check
      _
    $region27: #{tpu_custom_call.1} parent=1 // pred_check_branch
      %42 = sbr.rel (0) target = $region29
    $region28: #{tpu_custom_call.1} parent=1 // pred_region
      _
    $region29: #{tpu_custom_call.1} parent=1 // pred_fallthru
      _
    // Predicated region
    $region30: #{tpu_custom_call.1} parent=1 // pred_check
      _
    $region31: #{tpu_custom_call.1} parent=1 // pred_check_branch
      %44 = sbr.rel (0) target = $region33
    $region32: #{tpu_custom_call.1} parent=1 // pred_region
      _
    $region33: #{tpu_custom_call.1} parent=1 // pred_fallthru
      _
    // Predicated region
    $region34: #{tpu_custom_call.1} parent=1 // pred_check
      _
    $region35: #{tpu_custom_call.1} parent=1 // pred_check_branch
      %46 = sbr.rel (0) target = $region37
    $region36: #{tpu_custom_call.1} parent=1 // pred_region
      _
    $region37: #{tpu_custom_call.1} parent=1 // pred_fallthru
      _
    // Predicated region
    $region38: #{tpu_custom_call.1} parent=1 // pred_check
      _
    $region39: #{tpu_custom_call.1} parent=1 // pred_check_branch
      %48 = sbr.rel (0) target = $region41
    $region40: #{tpu_custom_call.1} parent=1 // pred_region
      %s50 = ssub.s32 256, 256
      %51 = vsyncadd [#allocation6], %s50
      %s52 = sshll.u32 [#allocation5], 4
      %s53 = int_to_ptr.vmem [resolvable:$true] %s52
      %58 = dma.hbm_to_vmem [thread:$0]  %s9, 256, %s53, [#allocation6], 128, 128, 8
    $region41: #{tpu_custom_call.1} parent=1 // pred_fallthru
      _
    // Predicated region
    $region42: #{tpu_custom_call.1} parent=1 // pred_check
      _
    $region43: #{tpu_custom_call.1} parent=1 // pred_check_branch
      %60 = sbr.rel (0) target = $region45
    $region44: #{tpu_custom_call.1} parent=1 // pred_region
      _
    $region45: #{tpu_custom_call.1} parent=1 // pred_fallthru
      _
    // Predicated region
    $region46: #{tpu_custom_call.1} parent=1 // pred_check
      _
    $region47: #{tpu_custom_call.1} parent=1 // pred_check_branch
      %62 = sbr.rel (0) target = $region49
    $region48: #{tpu_custom_call.1} parent=1 // pred_region
      %63 = dma.done [#allocation3], 256
    $region49: #{tpu_custom_call.1} parent=1 // pred_fallthru
      _
    // Predicated region
    $region50: #{tpu_custom_call.1} parent=1 // pred_check
      _
    $region51: #{tpu_custom_call.1} parent=1 // pred_check_branch
      %65 = sbr.rel (0) target = $region53
    $region52: #{tpu_custom_call.1} parent=1 // pred_region
      %66 = dma.done [#allocation6], 256
    $region53: #{tpu_custom_call.1} parent=1 // pred_fallthru
      _
    %v67 = vld [vmem:[%s10] sm:$0x1]
    %v68 = vld [vmem:[%s10 + $0x1] sm:$0x1]
    %v69 = vld [vmem:[%s10 + $0x2] sm:$0x1]
    %v70 = vld [vmem:[%s10 + $0x3] sm:$0x1]
    %v71 = vld [vmem:[%s10 + $0x4] sm:$0x1]
    %s72 = smul.u32 0, 16
    %v73 = vlaneseq
    %v74 = vshrl.u32 %v73, 7
    %v75 = vadd.s32 %v74, 8
    %v76 = vstv %s72
    %v77 = vadd.s32 %v76, %v74
    %v78 = vadd.s32 %v76, %v75
    %vm79 = vcmp.lt.s32.totalorder %v77, 0
    %v80 = vsub.s32 0, %v77
    %v81 = vsel %vm79, %v80, %v77
    %v82 = vshrl.u32 %v81, 3
    %v83 = vand.u32 %v81, 7
    %v84 = vsub.s32 0, %v83
    %v85 = vsel %vm79, %v84, %v83
    %vm86 = vcmp.lt.s32.totalorder %v78, 0
    %v87 = vsub.s32 0, %v78
    %v88 = vsel %vm86, %v87, %v78
    %v89 = vshrl.u32 %v88, 3
    %v90 = vand.u32 %v88, 7
    %v91 = vsub.s32 0, %v90
    %v92 = vsel %vm86, %v91, %v90
    %vm93 = vcmp.ne.s32.totalorder %v85, 0
    %vm94 = vcmp.ne.s32.totalorder %v92, 0
    %vm95 = vcmp.lt.s32.totalorder %v85, 0
    %vm96 = vcmp.lt.s32.totalorder %v92, 0
    %vm97 = vmand %vm95, %vm93
    %vm98 = vmand %vm96, %vm94
    %v99 = vadd.s32 %v85, 8
    %v100 = vadd.s32 %v92, 8
    %v101 = vsel %vm97, %v99, %v85
    %v102 = vsel %vm98, %v100, %v92
    %v103 = vlaneseq
    %v104 = vand.u32 %v103, 127
    %vm105 = vcmp.eq.s32.totalorder %v101, %v104
    %vm106 = vcmp.eq.s32.totalorder %v102, %v104
    %v107 = vsel %vm105, 1, 0
    %v108 = vsel %vm106, 1, 0
    %v109 = vcvt.s32.f32 %v107
    %v110 = vcvt.s32.f32 %v108
    %v111 = vld [vmem:[%s0] sm:$0xff]
    %v112 = vld [vmem:[%s0 + $0x8] sm:$0xff]
    %v113 = vld [vmem:[%s5] sm:$0xff]
    %v114 = vld [vmem:[%s5 + $0x8] sm:$0xff]
    %v115 = vld [vmem:[%s5 + $0x10] sm:$0xff]
    %v116 = vld [vmem:[%s5 + $0x18] sm:$0xff]
    %v117 = vld [vmem:[%s5 + $0x20] sm:$0xff]
    %v118 = vld [vmem:[%s5 + $0x28] sm:$0xff]
    %v119 = vld [vmem:[%s5 + $0x30] sm:$0xff]
    %v120 = vld [vmem:[%s5 + $0x38] sm:$0xff]
    %vm121 = vcmask 523264
    %v123 = vsel %vm121, %v109, 0
    %v126 = vsel %vm121, %v110, 0
    %128 = vmatprep.subr.mxu0 0.0
    %129 = vmatpush1.msra.mxu0 0.0
    %130 = vmatprep.subr.mxu0 0.0
    %131 = vmatpush1.msra.mxu0 0.0
    %132 = vmatprep.subr.mxu0 0.0
    %133 = vmatpush1.msra.mxu0 0.0
    %134 = vmatprep.subr.mxu0 0.0
    %135 = vmatpush1.msra.mxu0 0.0
    %136 = vmatprep.subr.mxu0 0.0
    %137 = vmatpush1.msra.mxu0 0.0
    %138 = vmatprep.subr.mxu0 0.0
    %139 = vmatpush1.msra.mxu0 0.0
    %140 = vmatprep.subr.mxu0 0.0
    %141 = vmatpush1.msra.mxu0 0.0
    %142 = vmatprep.subr.mxu0 0.0
    %143 = vmatpush1.msra.mxu0 0.0
    %144 = vmatprep.subr.mxu0 0.0
    %145 = vmatpush1.msra.mxu0 %v120
    %146 = vmatprep.subr.mxu0 0.0
    %147 = vmatpush1.msra.mxu0 %v119
    %148 = vmatprep.subr.mxu0 0.0
    %149 = vmatpush1.msra.mxu0 %v118
    %150 = vmatprep.subr.mxu0 0.0
    %151 = vmatpush1.msra.mxu0 %v117
    %152 = vmatprep.subr.mxu0 0.0
    %153 = vmatpush1.msra.mxu0 %v116
    %154 = vmatprep.subr.mxu0 0.0
    %155 = vmatpush1.msra.mxu0 %v115
    %156 = vmatprep.subr.mxu0 0.0
    %157 = vmatpush1.msra.mxu0 %v114
    %158 = vmatprep.subr.mxu0 0.0
    %159 = vmatpush1.msra.mxu0 %v113
    %160 = vmatprep.subr.mxu0 0.0
    %161 = vmatpush2.msra.mxu0 0.0
    %162 = vmatprep.subr.mxu0 0.0
    %163 = vmatpush2.msra.mxu0 0.0
    %164 = vmatprep.subr.mxu0 0.0
    %165 = vmatpush2.msra.mxu0 0.0
    %166 = vmatprep.subr.mxu0 0.0
    %167 = vmatpush2.msra.mxu0 0.0
    %168 = vmatprep.subr.mxu0 0.0
    %169 = vmatpush2.msra.mxu0 0.0
    %170 = vmatprep.subr.mxu0 0.0
    %171 = vmatpush2.msra.mxu0 0.0
    %172 = vmatprep.subr.mxu0 0.0
    %173 = vmatpush2.msra.mxu0 0.0
    %174 = vmatprep.subr.mxu0 0.0
    %175 = vmatpush2.msra.mxu0 0.0
    %176 = vmatprep.subr.mxu0 0.0
    %177 = vmatpush2.msra.mxu0 0.0
    %178 = vmatprep.subr.mxu0 0.0
    %179 = vmatpush2.msra.mxu0 0.0
    %180 = vmatprep.subr.mxu0 0.0
    %181 = vmatpush2.msra.mxu0 0.0
    %182 = vmatprep.subr.mxu0 0.0
    %183 = vmatpush2.msra.mxu0 0.0
    %184 = vmatprep.subr.mxu0 0.0
    %185 = vmatpush2.msra.mxu0 0.0
    %186 = vmatprep.subr.mxu0 0.0
    %187 = vmatpush2.msra.mxu0 0.0
    %188 = vmatprep.subr.mxu0 0.0
    %189 = vmatpush2.msra.mxu0 0.0
    %190 = vmatprep.subr.mxu0 0.0
    %191 = vmatpush2.msra.mxu0 0.0
    %192 = vmatprep.mubr.f32.mxu0 0.0
    %193 = vmatmul.mubr.f32.gmra.mxu0 %v123
    %v194 = vpop.f32.mrf.mxu0
    %v195 = vadd.f32 0.0, %v194
    %v196 = vpop.f32.mrf.mxu0
    %197 = vmatprep.mubr.f32.mxu0 0.0
    %198 = vmatmul.mubr.f32.gmra.mxu0 %v126
    %v199 = vpop.f32.mrf.mxu0
    %v200 = vadd.f32 0.0, %v199
    %v201 = vpop.f32.mrf.mxu0
    %202 = vdwg.mxu0
    %v203 = vadd.f32 %v111, %v195
    %v204 = vadd.f32 %v112, %v200
    %v205 = vld [vmem:[%s1] sm:$0xff]
    %v206 = vld [vmem:[%s1 + $0x8] sm:$0xff]
    %v207 = vlaneseq
    %v208 = vshrl.u32 %v207, 7
    %v209 = vsub.s32 0, %v208
    %v210 = vrot.slane %v205, %v209
    %212 = vbcast.lane.b32.xlu0 %v210, 256
    %v213 = vpop.permute.xlu0 %212
    %v214 = vlaneseq
    %v215 = vshrl.u32 %v214, 7
    %v216 = vsub.s32 1, %v215
    %v217 = vrot.slane %v205, %v216
    %219 = vbcast.lane.b32.xlu0 %v217, 256
    %v220 = vpop.permute.xlu0 %219
    %v221 = vlaneseq
    %v222 = vshrl.u32 %v221, 7
    %v223 = vsub.s32 2, %v222
    %v224 = vrot.slane %v205, %v223
    %226 = vbcast.lane.b32.xlu0 %v224, 256
    %v227 = vpop.permute.xlu0 %226
    %v228 = vlaneseq
    %v229 = vshrl.u32 %v228, 7
    %v230 = vsub.s32 3, %v229
    %v231 = vrot.slane %v205, %v230
    %233 = vbcast.lane.b32.xlu0 %v231, 256
    %v234 = vpop.permute.xlu0 %233
    %v235 = vlaneseq
    %v236 = vshrl.u32 %v235, 7
    %v237 = vsub.s32 4, %v236
    %v238 = vrot.slane %v205, %v237
    %240 = vbcast.lane.b32.xlu0 %v238, 256
    %v241 = vpop.permute.xlu0 %240
    %v242 = vlaneseq
    %v243 = vshrl.u32 %v242, 7
    %v244 = vsub.s32 5, %v243
    %v245 = vrot.slane %v205, %v244
    %247 = vbcast.lane.b32.xlu0 %v245, 256
    %v248 = vpop.permute.xlu0 %247
    %v249 = vlaneseq
    %v250 = vshrl.u32 %v249, 7
    %v251 = vsub.s32 6, %v250
    %v252 = vrot.slane %v205, %v251
    %254 = vbcast.lane.b32.xlu0 %v252, 256
    %v255 = vpop.permute.xlu0 %254
    %v256 = vlaneseq
    %v257 = vshrl.u32 %v256, 7
    %v258 = vsub.s32 7, %v257
    %v259 = vrot.slane %v205, %v258
    %261 = vbcast.lane.b32.xlu0 %v259, 256
    %v262 = vpop.permute.xlu0 %261
    %v263 = vlaneseq
    %v264 = vshrl.u32 %v263, 7
    %v265 = vsub.s32 0, %v264
    %v266 = vrot.slane %v206, %v265
    %268 = vbcast.lane.b32.xlu0 %v266, 256
    %v269 = vpop.permute.xlu0 %268
    %v270 = vlaneseq
    %v271 = vshrl.u32 %v270, 7
    %v272 = vsub.s32 1, %v271
    %v273 = vrot.slane %v206, %v272
    %275 = vbcast.lane.b32.xlu0 %v273, 256
    %v276 = vpop.permute.xlu0 %275
    %v277 = vlaneseq
    %v278 = vshrl.u32 %v277, 7
    %v279 = vsub.s32 2, %v278
    %v280 = vrot.slane %v206, %v279
    %282 = vbcast.lane.b32.xlu0 %v280, 256
    %v283 = vpop.permute.xlu0 %282
    %v284 = vlaneseq
    %v285 = vshrl.u32 %v284, 7
    %v286 = vsub.s32 3, %v285
    %v287 = vrot.slane %v206, %v286
    %289 = vbcast.lane.b32.xlu0 %v287, 256
    %v290 = vpop.permute.xlu0 %289
    %v291 = vlaneseq
    %v292 = vshrl.u32 %v291, 7
    %v293 = vsub.s32 4, %v292
    %v294 = vrot.slane %v206, %v293
    %296 = vbcast.lane.b32.xlu0 %v294, 256
    %v297 = vpop.permute.xlu0 %296
    %v298 = vlaneseq
    %v299 = vshrl.u32 %v298, 7
    %v300 = vsub.s32 5, %v299
    %v301 = vrot.slane %v206, %v300
    %303 = vbcast.lane.b32.xlu0 %v301, 256
    %v304 = vpop.permute.xlu0 %303
    %v305 = vlaneseq
    %v306 = vshrl.u32 %v305, 7
    %v307 = vsub.s32 6, %v306
    %v308 = vrot.slane %v206, %v307
    %310 = vbcast.lane.b32.xlu0 %v308, 256
    %v311 = vpop.permute.xlu0 %310
    %v312 = vlaneseq
    %v313 = vshrl.u32 %v312, 7
    %v314 = vsub.s32 7, %v313
    %v315 = vrot.slane %v206, %v314
    %317 = vbcast.lane.b32.xlu0 %v315, 256
    %v318 = vpop.permute.xlu0 %317
    %vm319 = vcmp.eq.s32.totalorder %v213, %v104
    %vm320 = vcmp.eq.s32.totalorder %v220, %v104
    %vm321 = vcmp.eq.s32.totalorder %v227, %v104
    %vm322 = vcmp.eq.s32.totalorder %v234, %v104
    %vm323 = vcmp.eq.s32.totalorder %v241, %v104
    %vm324 = vcmp.eq.s32.totalorder %v248, %v104
    %vm325 = vcmp.eq.s32.totalorder %v255, %v104
    %vm326 = vcmp.eq.s32.totalorder %v262, %v104
    %vm327 = vcmp.eq.s32.totalorder %v269, %v104
    %vm328 = vcmp.eq.s32.totalorder %v276, %v104
    %vm329 = vcmp.eq.s32.totalorder %v283, %v104
    %vm330 = vcmp.eq.s32.totalorder %v290, %v104
    %vm331 = vcmp.eq.s32.totalorder %v297, %v104
    %vm332 = vcmp.eq.s32.totalorder %v304, %v104
    %vm333 = vcmp.eq.s32.totalorder %v311, %v104
    %vm334 = vcmp.eq.s32.totalorder %v318, %v104
    %v335 = vsel %vm319, 1, 0
    %v336 = vsel %vm320, 1, 0
    %v337 = vsel %vm321, 1, 0
    %v338 = vsel %vm322, 1, 0
    %v339 = vsel %vm323, 1, 0
    %v340 = vsel %vm324, 1, 0
    %v341 = vsel %vm325, 1, 0
    %v342 = vsel %vm326, 1, 0
    %v343 = vsel %vm327, 1, 0
    %v344 = vsel %vm328, 1, 0
    %v345 = vsel %vm329, 1, 0
    %v346 = vsel %vm330, 1, 0
    %v347 = vsel %vm331, 1, 0
    %v348 = vsel %vm332, 1, 0
    %v349 = vsel %vm333, 1, 0
    %v350 = vsel %vm334, 1, 0
    %v351 = vcvt.s32.f32 %v335
    %v352 = vcvt.s32.f32 %v336
    %v353 = vcvt.s32.f32 %v337
    %v354 = vcvt.s32.f32 %v338
    %v355 = vcvt.s32.f32 %v339
    %v356 = vcvt.s32.f32 %v340
    %v357 = vcvt.s32.f32 %v341
    %v358 = vcvt.s32.f32 %v342
    %v359 = vcvt.s32.f32 %v343
    %v360 = vcvt.s32.f32 %v344
    %v361 = vcvt.s32.f32 %v345
    %v362 = vcvt.s32.f32 %v346
    %v363 = vcvt.s32.f32 %v347
    %v364 = vcvt.s32.f32 %v348
    %v365 = vcvt.s32.f32 %v349
    %v366 = vcvt.s32.f32 %v350
    %v367 = vld [vmem:[%s6] sm:$0xff]
    %v368 = vld [vmem:[%s6 + $0x8] sm:$0xff]
    %v369 = vld [vmem:[%s6 + $0x10] sm:$0xff]
    %v370 = vld [vmem:[%s6 + $0x18] sm:$0xff]
    %v371 = vld [vmem:[%s2] sm:$0xff]
    %v372 = vld [vmem:[%s2 + $0x8] sm:$0xff]
    %v373 = vlaneseq
    %v374 = vshrl.u32 %v373, 7
    %v375 = vsub.s32 0, %v374
    %v376 = vrot.slane %v371, %v375
    %378 = vbcast.lane.b32.xlu0 %v376, 256
    %v379 = vpop.permute.xlu0 %378
    %v380 = vlaneseq
    %v381 = vshrl.u32 %v380, 7
    %v382 = vsub.s32 1, %v381
    %v383 = vrot.slane %v371, %v382
    %385 = vbcast.lane.b32.xlu0 %v383, 256
    %v386 = vpop.permute.xlu0 %385
    %v387 = vlaneseq
    %v388 = vshrl.u32 %v387, 7
    %v389 = vsub.s32 2, %v388
    %v390 = vrot.slane %v371, %v389
    %392 = vbcast.lane.b32.xlu0 %v390, 256
    %v393 = vpop.permute.xlu0 %392
    %v394 = vlaneseq
    %v395 = vshrl.u32 %v394, 7
    %v396 = vsub.s32 3, %v395
    %v397 = vrot.slane %v371, %v396
    %399 = vbcast.lane.b32.xlu0 %v397, 256
    %v400 = vpop.permute.xlu0 %399
    %v401 = vlaneseq
    %v402 = vshrl.u32 %v401, 7
    %v403 = vsub.s32 4, %v402
    %v404 = vrot.slane %v371, %v403
    %406 = vbcast.lane.b32.xlu0 %v404, 256
    %v407 = vpop.permute.xlu0 %406
    %v408 = vlaneseq
    %v409 = vshrl.u32 %v408, 7
    %v410 = vsub.s32 5, %v409
    %v411 = vrot.slane %v371, %v410
    %413 = vbcast.lane.b32.xlu0 %v411, 256
    %v414 = vpop.permute.xlu0 %413
    %v415 = vlaneseq
    %v416 = vshrl.u32 %v415, 7
    %v417 = vsub.s32 6, %v416
    %v418 = vrot.slane %v371, %v417
    %420 = vbcast.lane.b32.xlu0 %v418, 256
    %v421 = vpop.permute.xlu0 %420
    %v422 = vlaneseq
    %v423 = vshrl.u32 %v422, 7
    %v424 = vsub.s32 7, %v423
    %v425 = vrot.slane %v371, %v424
    %427 = vbcast.lane.b32.xlu0 %v425, 256
    %v428 = vpop.permute.xlu0 %427
    %v429 = vlaneseq
    %v430 = vshrl.u32 %v429, 7
    %v431 = vsub.s32 0, %v430
    %v432 = vrot.slane %v372, %v431
    %434 = vbcast.lane.b32.xlu0 %v432, 256
    %v435 = vpop.permute.xlu0 %434
    %v436 = vlaneseq
    %v437 = vshrl.u32 %v436, 7
    %v438 = vsub.s32 1, %v437
    %v439 = vrot.slane %v372, %v438
    %441 = vbcast.lane.b32.xlu0 %v439, 256
    %v442 = vpop.permute.xlu0 %441
    %v443 = vlaneseq
    %v444 = vshrl.u32 %v443, 7
    %v445 = vsub.s32 2, %v444
    %v446 = vrot.slane %v372, %v445
    %448 = vbcast.lane.b32.xlu0 %v446, 256
    %v449 = vpop.permute.xlu0 %448
    %v450 = vlaneseq
    %v451 = vshrl.u32 %v450, 7
    %v452 = vsub.s32 3, %v451
    %v453 = vrot.slane %v372, %v452
    %455 = vbcast.lane.b32.xlu0 %v453, 256
    %v456 = vpop.permute.xlu0 %455
    %v457 = vlaneseq
    %v458 = vshrl.u32 %v457, 7
    %v459 = vsub.s32 4, %v458
    %v460 = vrot.slane %v372, %v459
    %462 = vbcast.lane.b32.xlu0 %v460, 256
    %v463 = vpop.permute.xlu0 %462
    %v464 = vlaneseq
    %v465 = vshrl.u32 %v464, 7
    %v466 = vsub.s32 5, %v465
    %v467 = vrot.slane %v372, %v466
    %469 = vbcast.lane.b32.xlu0 %v467, 256
    %v470 = vpop.permute.xlu0 %469
    %v471 = vlaneseq
    %v472 = vshrl.u32 %v471, 7
    %v473 = vsub.s32 6, %v472
    %v474 = vrot.slane %v372, %v473
    %476 = vbcast.lane.b32.xlu0 %v474, 256
    %v477 = vpop.permute.xlu0 %476
    %v478 = vlaneseq
    %v479 = vshrl.u32 %v478, 7
    %v480 = vsub.s32 7, %v479
    %v481 = vrot.slane %v372, %v480
    %483 = vbcast.lane.b32.xlu0 %v481, 256
    %v484 = vpop.permute.xlu0 %483
    %vm485 = vcmp.eq.s32.totalorder %v379, %v104
    %vm486 = vcmp.eq.s32.totalorder %v386, %v104
    %vm487 = vcmp.eq.s32.totalorder %v393, %v104
    %vm488 = vcmp.eq.s32.totalorder %v400, %v104
    %vm489 = vcmp.eq.s32.totalorder %v407, %v104
    %vm490 = vcmp.eq.s32.totalorder %v414, %v104
    %vm491 = vcmp.eq.s32.totalorder %v421, %v104
    %vm492 = vcmp.eq.s32.totalorder %v428, %v104
    %vm493 = vcmp.eq.s32.totalorder %v435, %v104
    %vm494 = vcmp.eq.s32.totalorder %v442, %v104
    %vm495 = vcmp.eq.s32.totalorder %v449, %v104
    %vm496 = vcmp.eq.s32.totalorder %v456, %v104
    %vm497 = vcmp.eq.s32.totalorder %v463, %v104
    %vm498 = vcmp.eq.s32.totalorder %v470, %v104
    %vm499 = vcmp.eq.s32.totalorder %v477, %v104
    %vm500 = vcmp.eq.s32.totalorder %v484, %v104
    %v501 = vsel %vm485, 1, 0
    %v502 = vsel %vm486, 1, 0
    %v503 = vsel %vm487, 1, 0
    %v504 = vsel %vm488, 1, 0
    %v505 = vsel %vm489, 1, 0
    %v506 = vsel %vm490, 1, 0
    %v507 = vsel %vm491, 1, 0
    %v508 = vsel %vm492, 1, 0
    %v509 = vsel %vm493, 1, 0
    %v510 = vsel %vm494, 1, 0
    %v511 = vsel %vm495, 1, 0
    %v512 = vsel %vm496, 1, 0
    %v513 = vsel %vm497, 1, 0
    %v514 = vsel %vm498, 1, 0
    %v515 = vsel %vm499, 1, 0
    %v516 = vsel %vm500, 1, 0
    %v517 = vcvt.s32.f32 %v501
    %v518 = vcvt.s32.f32 %v502
    %v519 = vcvt.s32.f32 %v503
    %v520 = vcvt.s32.f32 %v504
    %v521 = vcvt.s32.f32 %v505
    %v522 = vcvt.s32.f32 %v506
    %v523 = vcvt.s32.f32 %v507
    %v524 = vcvt.s32.f32 %v508
    %v525 = vcvt.s32.f32 %v509
    %v526 = vcvt.s32.f32 %v510
    %v527 = vcvt.s32.f32 %v511
    %v528 = vcvt.s32.f32 %v512
    %v529 = vcvt.s32.f32 %v513
    %v530 = vcvt.s32.f32 %v514
    %v531 = vcvt.s32.f32 %v515
    %v532 = vcvt.s32.f32 %v516
    %s533 = scalar_lea.vmem %s6, 32
    %v534 = vld [vmem:[%s533] sm:$0xff]
    %v535 = vld [vmem:[%s533 + $0x8] sm:$0xff]
    %v536 = vld [vmem:[%s533 + $0x10] sm:$0xff]
    %v537 = vld [vmem:[%s533 + $0x18] sm:$0xff]
    %vm538 = vcmask 261120
    %v540 = vsel %vm538, %v517, 0
    %v543 = vsel %vm538, %v518, 0
    %v546 = vsel %vm538, %v519, 0
    %v549 = vsel %vm538, %v520, 0
    %v552 = vsel %vm538, %v521, 0
    %v555 = vsel %vm538, %v522, 0
    %v558 = vsel %vm538, %v523, 0
    %v561 = vsel %vm538, %v524, 0
    %v564 = vsel %vm538, %v525, 0
    %v567 = vsel %vm538, %v526, 0
    %v570 = vsel %vm538, %v527, 0
    %v573 = vsel %vm538, %v528, 0
    %v576 = vsel %vm538, %v529, 0
    %v579 = vsel %vm538, %v530, 0
    %v582 = vsel %vm538, %v531, 0
    %v585 = vsel %vm538, %v532, 0
    %587 = vmatprep.subr.mxu0 0.0
    %588 = vmatpush1.msra.mxu0 0.0
    %589 = vmatprep.subr.mxu0 0.0
    %590 = vmatpush1.msra.mxu0 0.0
    %591 = vmatprep.subr.mxu0 0.0
    %592 = vmatpush1.msra.mxu0 0.0
    %593 = vmatprep.subr.mxu0 0.0
    %594 = vmatpush1.msra.mxu0 0.0
    %595 = vmatprep.subr.mxu0 0.0
    %596 = vmatpush1.msra.mxu0 0.0
    %597 = vmatprep.subr.mxu0 0.0
    %598 = vmatpush1.msra.mxu0 0.0
    %599 = vmatprep.subr.mxu0 0.0
    %600 = vmatpush1.msra.mxu0 0.0
    %601 = vmatprep.subr.mxu0 0.0
    %602 = vmatpush1.msra.mxu0 0.0
    %603 = vmatprep.subr.mxu0 0.0
    %604 = vmatpush1.msra.mxu0 0.0
    %605 = vmatprep.subr.mxu0 0.0
    %606 = vmatpush1.msra.mxu0 0.0
    %607 = vmatprep.subr.mxu0 0.0
    %608 = vmatpush1.msra.mxu0 0.0
    %609 = vmatprep.subr.mxu0 0.0
    %610 = vmatpush1.msra.mxu0 0.0
    %611 = vmatprep.subr.mxu0 0.0
    %612 = vmatpush1.msra.mxu0 %v537
    %613 = vmatprep.subr.mxu0 0.0
    %614 = vmatpush1.msra.mxu0 %v536
    %615 = vmatprep.subr.mxu0 0.0
    %616 = vmatpush1.msra.mxu0 %v535
    %617 = vmatprep.subr.mxu0 0.0
    %618 = vmatpush1.msra.mxu0 %v534
    %619 = vmatprep.subr.mxu0 0.0
    %620 = vmatpush2.msra.mxu0 0.0
    %621 = vmatprep.subr.mxu0 0.0
    %622 = vmatpush2.msra.mxu0 0.0
    %623 = vmatprep.subr.mxu0 0.0
    %624 = vmatpush2.msra.mxu0 0.0
    %625 = vmatprep.subr.mxu0 0.0
    %626 = vmatpush2.msra.mxu0 0.0
    %627 = vmatprep.subr.mxu0 0.0
    %628 = vmatpush2.msra.mxu0 0.0
    %629 = vmatprep.subr.mxu0 0.0
    %630 = vmatpush2.msra.mxu0 0.0
    %631 = vmatprep.subr.mxu0 0.0
    %632 = vmatpush2.msra.mxu0 0.0
    %633 = vmatprep.subr.mxu0 0.0
    %634 = vmatpush2.msra.mxu0 0.0
    %635 = vmatprep.subr.mxu0 0.0
    %636 = vmatpush2.msra.mxu0 0.0
    %637 = vmatprep.subr.mxu0 0.0
    %638 = vmatpush2.msra.mxu0 0.0
    %639 = vmatprep.subr.mxu0 0.0
    %640 = vmatpush2.msra.mxu0 0.0
    %641 = vmatprep.subr.mxu0 0.0
    %642 = vmatpush2.msra.mxu0 0.0
    %643 = vmatprep.subr.mxu0 0.0
    %644 = vmatpush2.msra.mxu0 0.0
    %645 = vmatprep.subr.mxu0 0.0
    %646 = vmatpush2.msra.mxu0 0.0
    %647 = vmatprep.subr.mxu0 0.0
    %648 = vmatpush2.msra.mxu0 0.0
    %649 = vmatprep.subr.mxu0 0.0
    %650 = vmatpush2.msra.mxu0 0.0
    %651 = vmatprep.mubr.f32.mxu0 0.0
    %652 = vmatmul.mubr.f32.gmra.mxu0 %v540
    %v653 = vpop.f32.mrf.mxu0
    %v654 = vadd.f32 0.0, %v653
    %v655 = vpop.f32.mrf.mxu0
    %656 = vmatprep.mubr.f32.mxu0 0.0
    %657 = vmatmul.mubr.f32.gmra.mxu0 %v543
    %v658 = vpop.f32.mrf.mxu0
    %v659 = vadd.f32 0.0, %v658
    %v660 = vpop.f32.mrf.mxu0
    %661 = vmatprep.mubr.f32.mxu0 0.0
    %662 = vmatmul.mubr.f32.gmra.mxu0 %v546
    %v663 = vpop.f32.mrf.mxu0
    %v664 = vadd.f32 0.0, %v663
    %v665 = vpop.f32.mrf.mxu0
    %666 = vmatprep.mubr.f32.mxu0 0.0
    %667 = vmatmul.mubr.f32.gmra.mxu0 %v549
    %v668 = vpop.f32.mrf.mxu0
    %v669 = vadd.f32 0.0, %v668
    %v670 = vpop.f32.mrf.mxu0
    %671 = vmatprep.mubr.f32.mxu0 0.0
    %672 = vmatmul.mubr.f32.gmra.mxu0 %v552
    %v673 = vpop.f32.mrf.mxu0
    %v674 = vadd.f32 0.0, %v673
    %v675 = vpop.f32.mrf.mxu0
    %676 = vmatprep.mubr.f32.mxu0 0.0
    %677 = vmatmul.mubr.f32.gmra.mxu0 %v555
    %v678 = vpop.f32.mrf.mxu0
    %v679 = vadd.f32 0.0, %v678
    %v680 = vpop.f32.mrf.mxu0
    %681 = vmatprep.mubr.f32.mxu0 0.0
    %682 = vmatmul.mubr.f32.gmra.mxu0 %v558
    %v683 = vpop.f32.mrf.mxu0
    %v684 = vadd.f32 0.0, %v683
    %v685 = vpop.f32.mrf.mxu0
    %686 = vmatprep.mubr.f32.mxu0 0.0
    %687 = vmatmul.mubr.f32.gmra.mxu0 %v561
    %v688 = vpop.f32.mrf.mxu0
    %v689 = vadd.f32 0.0, %v688
    %v690 = vpop.f32.mrf.mxu0
    %691 = vmatprep.mubr.f32.mxu0 0.0
    %692 = vmatmul.mubr.f32.gmra.mxu0 %v564
    %v693 = vpop.f32.mrf.mxu0
    %v694 = vadd.f32 0.0, %v693
    %v695 = vpop.f32.mrf.mxu0
    %696 = vmatprep.mubr.f32.mxu0 0.0
    %697 = vmatmul.mubr.f32.gmra.mxu0 %v567
    %v698 = vpop.f32.mrf.mxu0
    %v699 = vadd.f32 0.0, %v698
    %v700 = vpop.f32.mrf.mxu0
    %701 = vmatprep.mubr.f32.mxu0 0.0
    %702 = vmatmul.mubr.f32.gmra.mxu0 %v570
    %v703 = vpop.f32.mrf.mxu0
    %v704 = vadd.f32 0.0, %v703
    %v705 = vpop.f32.mrf.mxu0
    %706 = vmatprep.mubr.f32.mxu0 0.0
    %707 = vmatmul.mubr.f32.gmra.mxu0 %v573
    %v708 = vpop.f32.mrf.mxu0
    %v709 = vadd.f32 0.0, %v708
    %v710 = vpop.f32.mrf.mxu0
    %711 = vmatprep.mubr.f32.mxu0 0.0
    %712 = vmatmul.mubr.f32.gmra.mxu0 %v576
    %v713 = vpop.f32.mrf.mxu0
    %v714 = vadd.f32 0.0, %v713
    %v715 = vpop.f32.mrf.mxu0
    %716 = vmatprep.mubr.f32.mxu0 0.0
    %717 = vmatmul.mubr.f32.gmra.mxu0 %v579
    %v718 = vpop.f32.mrf.mxu0
    %v719 = vadd.f32 0.0, %v718
    %v720 = vpop.f32.mrf.mxu0
    %721 = vmatprep.mubr.f32.mxu0 0.0
    %722 = vmatmul.mubr.f32.gmra.mxu0 %v582
    %v723 = vpop.f32.mrf.mxu0
    %v724 = vadd.f32 0.0, %v723
    %v725 = vpop.f32.mrf.mxu0
    %726 = vmatprep.mubr.f32.mxu0 0.0
    %727 = vmatmul.mubr.f32.gmra.mxu0 %v585
    %v728 = vpop.f32.mrf.mxu0
    %v729 = vadd.f32 0.0, %v728
    %v730 = vpop.f32.mrf.mxu0
    %731 = vdwg.mxu0
    %v733 = vsel %vm538, %v351, 0
    %v736 = vsel %vm538, %v352, 0
    %v739 = vsel %vm538, %v353, 0
    %v742 = vsel %vm538, %v354, 0
    %v745 = vsel %vm538, %v355, 0
    %v748 = vsel %vm538, %v356, 0
    %v751 = vsel %vm538, %v357, 0
    %v754 = vsel %vm538, %v358, 0
    %v757 = vsel %vm538, %v359, 0
    %v760 = vsel %vm538, %v360, 0
    %v763 = vsel %vm538, %v361, 0
    %v766 = vsel %vm538, %v362, 0
    %v769 = vsel %vm538, %v363, 0
    %v772 = vsel %vm538, %v364, 0
    %v775 = vsel %vm538, %v365, 0
    %v778 = vsel %vm538, %v366, 0
    %780 = vmatprep.subr.mxu0 0.0
    %781 = vmatpush1.msra.mxu0 0.0
    %782 = vmatprep.subr.mxu0 0.0
    %783 = vmatpush1.msra.mxu0 0.0
    %784 = vmatprep.subr.mxu0 0.0
    %785 = vmatpush1.msra.mxu0 0.0
    %786 = vmatprep.subr.mxu0 0.0
    %787 = vmatpush1.msra.mxu0 0.0
    %788 = vmatprep.subr.mxu0 0.0
    %789 = vmatpush1.msra.mxu0 0.0
    %790 = vmatprep.subr.mxu0 0.0
    %791 = vmatpush1.msra.mxu0 0.0
    %792 = vmatprep.subr.mxu0 0.0
    %793 = vmatpush1.msra.mxu0 0.0
    %794 = vmatprep.subr.mxu0 0.0
    %795 = vmatpush1.msra.mxu0 0.0
    %796 = vmatprep.subr.mxu0 0.0
    %797 = vmatpush1.msra.mxu0 0.0
    %798 = vmatprep.subr.mxu0 0.0
    %799 = vmatpush1.msra.mxu0 0.0
    %800 = vmatprep.subr.mxu0 0.0
    %801 = vmatpush1.msra.mxu0 0.0
    %802 = vmatprep.subr.mxu0 0.0
    %803 = vmatpush1.msra.mxu0 0.0
    %804 = vmatprep.subr.mxu0 0.0
    %805 = vmatpush1.msra.mxu0 %v370
    %806 = vmatprep.subr.mxu0 0.0
    %807 = vmatpush1.msra.mxu0 %v369
    %808 = vmatprep.subr.mxu0 0.0
    %809 = vmatpush1.msra.mxu0 %v368
    %810 = vmatprep.subr.mxu0 0.0
    %811 = vmatpush1.msra.mxu0 %v367
    %812 = vmatprep.subr.mxu0 0.0
    %813 = vmatpush2.msra.mxu0 0.0
    %814 = vmatprep.subr.mxu0 0.0
    %815 = vmatpush2.msra.mxu0 0.0
    %816 = vmatprep.subr.mxu0 0.0
    %817 = vmatpush2.msra.mxu0 0.0
    %818 = vmatprep.subr.mxu0 0.0
    %819 = vmatpush2.msra.mxu0 0.0
    %820 = vmatprep.subr.mxu0 0.0
    %821 = vmatpush2.msra.mxu0 0.0
    %822 = vmatprep.subr.mxu0 0.0
    %823 = vmatpush2.msra.mxu0 0.0
    %824 = vmatprep.subr.mxu0 0.0
    %825 = vmatpush2.msra.mxu0 0.0
    %826 = vmatprep.subr.mxu0 0.0
    %827 = vmatpush2.msra.mxu0 0.0
    %828 = vmatprep.subr.mxu0 0.0
    %829 = vmatpush2.msra.mxu0 0.0
    %830 = vmatprep.subr.mxu0 0.0
    %831 = vmatpush2.msra.mxu0 0.0
    %832 = vmatprep.subr.mxu0 0.0
    %833 = vmatpush2.msra.mxu0 0.0
    %834 = vmatprep.subr.mxu0 0.0
    %835 = vmatpush2.msra.mxu0 0.0
    %836 = vmatprep.subr.mxu0 0.0
    %837 = vmatpush2.msra.mxu0 0.0
    %838 = vmatprep.subr.mxu0 0.0
    %839 = vmatpush2.msra.mxu0 0.0
    %840 = vmatprep.subr.mxu0 0.0
    %841 = vmatpush2.msra.mxu0 0.0
    %842 = vmatprep.subr.mxu0 0.0
    %843 = vmatpush2.msra.mxu0 0.0
    %844 = vmatprep.mubr.f32.mxu0 0.0
    %845 = vmatmul.mubr.f32.gmra.mxu0 %v733
    %v846 = vpop.f32.mrf.mxu0
    %v847 = vadd.f32 %v654, %v846
    %v848 = vpop.f32.mrf.mxu0
    %849 = vmatprep.mubr.f32.mxu0 0.0
    %850 = vmatmul.mubr.f32.gmra.mxu0 %v736
    %v851 = vpop.f32.mrf.mxu0
    %v852 = vadd.f32 %v659, %v851
    %v853 = vpop.f32.mrf.mxu0
    %854 = vmatprep.mubr.f32.mxu0 0.0
    %855 = vmatmul.mubr.f32.gmra.mxu0 %v739
    %v856 = vpop.f32.mrf.mxu0
    %v857 = vadd.f32 %v664, %v856
    %v858 = vpop.f32.mrf.mxu0
    %859 = vmatprep.mubr.f32.mxu0 0.0
    %860 = vmatmul.mubr.f32.gmra.mxu0 %v742
    %v861 = vpop.f32.mrf.mxu0
    %v862 = vadd.f32 %v669, %v861
    %v863 = vpop.f32.mrf.mxu0
    %864 = vmatprep.mubr.f32.mxu0 0.0
    %865 = vmatmul.mubr.f32.gmra.mxu0 %v745
    %v866 = vpop.f32.mrf.mxu0
    %v867 = vadd.f32 %v674, %v866
    %v868 = vpop.f32.mrf.mxu0
    %869 = vmatprep.mubr.f32.mxu0 0.0
    %870 = vmatmul.mubr.f32.gmra.mxu0 %v748
    %v871 = vpop.f32.mrf.mxu0
    %v872 = vadd.f32 %v679, %v871
    %v873 = vpop.f32.mrf.mxu0
    %874 = vmatprep.mubr.f32.mxu0 0.0
    %875 = vmatmul.mubr.f32.gmra.mxu0 %v751
    %v876 = vpop.f32.mrf.mxu0
    %v877 = vadd.f32 %v684, %v876
    %v878 = vpop.f32.mrf.mxu0
    %879 = vmatprep.mubr.f32.mxu0 0.0
    %880 = vmatmul.mubr.f32.gmra.mxu0 %v754
    %v881 = vpop.f32.mrf.mxu0
    %v882 = vadd.f32 %v689, %v881
    %v883 = vpop.f32.mrf.mxu0
    %884 = vmatprep.mubr.f32.mxu0 0.0
    %885 = vmatmul.mubr.f32.gmra.mxu0 %v757
    %v886 = vpop.f32.mrf.mxu0
    %v887 = vadd.f32 %v694, %v886
    %v888 = vpop.f32.mrf.mxu0
    %889 = vmatprep.mubr.f32.mxu0 0.0
    %890 = vmatmul.mubr.f32.gmra.mxu0 %v760
    %v891 = vpop.f32.mrf.mxu0
    %v892 = vadd.f32 %v699, %v891
    %v893 = vpop.f32.mrf.mxu0
    %894 = vmatprep.mubr.f32.mxu0 0.0
    %895 = vmatmul.mubr.f32.gmra.mxu0 %v763
    %v896 = vpop.f32.mrf.mxu0
    %v897 = vadd.f32 %v704, %v896
    %v898 = vpop.f32.mrf.mxu0
    %899 = vmatprep.mubr.f32.mxu0 0.0
    %900 = vmatmul.mubr.f32.gmra.mxu0 %v766
    %v901 = vpop.f32.mrf.mxu0
    %v902 = vadd.f32 %v709, %v901
    %v903 = vpop.f32.mrf.mxu0
    %904 = vmatprep.mubr.f32.mxu0 0.0
    %905 = vmatmul.mubr.f32.gmra.mxu0 %v769
    %v906 = vpop.f32.mrf.mxu0
    %v907 = vadd.f32 %v714, %v906
    %v908 = vpop.f32.mrf.mxu0
    %909 = vmatprep.mubr.f32.mxu0 0.0
    %910 = vmatmul.mubr.f32.gmra.mxu0 %v772
    %v911 = vpop.f32.mrf.mxu0
    %v912 = vadd.f32 %v719, %v911
    %v913 = vpop.f32.mrf.mxu0
    %914 = vmatprep.mubr.f32.mxu0 0.0
    %915 = vmatmul.mubr.f32.gmra.mxu0 %v775
    %v916 = vpop.f32.mrf.mxu0
    %v917 = vadd.f32 %v724, %v916
    %v918 = vpop.f32.mrf.mxu0
    %919 = vmatprep.mubr.f32.mxu0 0.0
    %920 = vmatmul.mubr.f32.gmra.mxu0 %v778
    %v921 = vpop.f32.mrf.mxu0
    %v922 = vadd.f32 %v729, %v921
    %v923 = vpop.f32.mrf.mxu0
    %924 = vdwg.mxu0
    %v925 = vld [vmem:[%s3] sm:$0xff]
    %v926 = vld [vmem:[%s3 + $0x8] sm:$0xff]
    %v927 = vlaneseq
    %v928 = vshrl.u32 %v927, 7
    %v929 = vsub.s32 0, %v928
    %v930 = vrot.slane %v925, %v929
    %932 = vbcast.lane.b32.xlu0 %v930, 256
    %v933 = vpop.permute.xlu0 %932
    %v934 = vlaneseq
    %v935 = vshrl.u32 %v934, 7
    %v936 = vsub.s32 1, %v935
    %v937 = vrot.slane %v925, %v936
    %939 = vbcast.lane.b32.xlu0 %v937, 256
    %v940 = vpop.permute.xlu0 %939
    %v941 = vlaneseq
    %v942 = vshrl.u32 %v941, 7
    %v943 = vsub.s32 2, %v942
    %v944 = vrot.slane %v925, %v943
    %946 = vbcast.lane.b32.xlu0 %v944, 256
    %v947 = vpop.permute.xlu0 %946
    %v948 = vlaneseq
    %v949 = vshrl.u32 %v948, 7
    %v950 = vsub.s32 3, %v949
    %v951 = vrot.slane %v925, %v950
    %953 = vbcast.lane.b32.xlu0 %v951, 256
    %v954 = vpop.permute.xlu0 %953
    %v955 = vlaneseq
    %v956 = vshrl.u32 %v955, 7
    %v957 = vsub.s32 4, %v956
    %v958 = vrot.slane %v925, %v957
    %960 = vbcast.lane.b32.xlu0 %v958, 256
    %v961 = vpop.permute.xlu0 %960
    %v962 = vlaneseq
    %v963 = vshrl.u32 %v962, 7
    %v964 = vsub.s32 5, %v963
    %v965 = vrot.slane %v925, %v964
    %967 = vbcast.lane.b32.xlu0 %v965, 256
    %v968 = vpop.permute.xlu0 %967
    %v969 = vlaneseq
    %v970 = vshrl.u32 %v969, 7
    %v971 = vsub.s32 6, %v970
    %v972 = vrot.slane %v925, %v971
    %974 = vbcast.lane.b32.xlu0 %v972, 256
    %v975 = vpop.permute.xlu0 %974
    %v976 = vlaneseq
    %v977 = vshrl.u32 %v976, 7
    %v978 = vsub.s32 7, %v977
    %v979 = vrot.slane %v925, %v978
    %981 = vbcast.lane.b32.xlu0 %v979, 256
    %v982 = vpop.permute.xlu0 %981
    %v983 = vlaneseq
    %v984 = vshrl.u32 %v983, 7
    %v985 = vsub.s32 0, %v984
    %v986 = vrot.slane %v926, %v985
    %988 = vbcast.lane.b32.xlu0 %v986, 256
    %v989 = vpop.permute.xlu0 %988
    %v990 = vlaneseq
    %v991 = vshrl.u32 %v990, 7
    %v992 = vsub.s32 1, %v991
    %v993 = vrot.slane %v926, %v992
    %995 = vbcast.lane.b32.xlu0 %v993, 256
    %v996 = vpop.permute.xlu0 %995
    %v997 = vlaneseq
    %v998 = vshrl.u32 %v997, 7
    %v999 = vsub.s32 2, %v998
    %v1000 = vrot.slane %v926, %v999
    %1002 = vbcast.lane.b32.xlu0 %v1000, 256
    %v1003 = vpop.permute.xlu0 %1002
    %v1004 = vlaneseq
    %v1005 = vshrl.u32 %v1004, 7
    %v1006 = vsub.s32 3, %v1005
    %v1007 = vrot.slane %v926, %v1006
    %1009 = vbcast.lane.b32.xlu0 %v1007, 256
    %v1010 = vpop.permute.xlu0 %1009
    %v1011 = vlaneseq
    %v1012 = vshrl.u32 %v1011, 7
    %v1013 = vsub.s32 4, %v1012
    %v1014 = vrot.slane %v926, %v1013
    %1016 = vbcast.lane.b32.xlu0 %v1014, 256
    %v1017 = vpop.permute.xlu0 %1016
    %v1018 = vlaneseq
    %v1019 = vshrl.u32 %v1018, 7
    %v1020 = vsub.s32 5, %v1019
    %v1021 = vrot.slane %v926, %v1020
    %1023 = vbcast.lane.b32.xlu0 %v1021, 256
    %v1024 = vpop.permute.xlu0 %1023
    %v1025 = vlaneseq
    %v1026 = vshrl.u32 %v1025, 7
    %v1027 = vsub.s32 6, %v1026
    %v1028 = vrot.slane %v926, %v1027
    %1030 = vbcast.lane.b32.xlu0 %v1028, 256
    %v1031 = vpop.permute.xlu0 %1030
    %v1032 = vlaneseq
    %v1033 = vshrl.u32 %v1032, 7
    %v1034 = vsub.s32 7, %v1033
    %v1035 = vrot.slane %v926, %v1034
    %1037 = vbcast.lane.b32.xlu0 %v1035, 256
    %v1038 = vpop.permute.xlu0 %1037
    %vm1039 = vcmp.eq.s32.totalorder %v933, %v104
    %vm1040 = vcmp.eq.s32.totalorder %v940, %v104
    %vm1041 = vcmp.eq.s32.totalorder %v947, %v104
    %vm1042 = vcmp.eq.s32.totalorder %v954, %v104
    %vm1043 = vcmp.eq.s32.totalorder %v961, %v104
    %vm1044 = vcmp.eq.s32.totalorder %v968, %v104
    %vm1045 = vcmp.eq.s32.totalorder %v975, %v104
    %vm1046 = vcmp.eq.s32.totalorder %v982, %v104
    %vm1047 = vcmp.eq.s32.totalorder %v989, %v104
    %vm1048 = vcmp.eq.s32.totalorder %v996, %v104
    %vm1049 = vcmp.eq.s32.totalorder %v1003, %v104
    %vm1050 = vcmp.eq.s32.totalorder %v1010, %v104
    %vm1051 = vcmp.eq.s32.totalorder %v1017, %v104
    %vm1052 = vcmp.eq.s32.totalorder %v1024, %v104
    %vm1053 = vcmp.eq.s32.totalorder %v1031, %v104
    %vm1054 = vcmp.eq.s32.totalorder %v1038, %v104
    %v1055 = vsel %vm1039, 1, 0
    %v1056 = vsel %vm1040, 1, 0
    %v1057 = vsel %vm1041, 1, 0
    %v1058 = vsel %vm1042, 1, 0
    %v1059 = vsel %vm1043, 1, 0
    %v1060 = vsel %vm1044, 1, 0
    %v1061 = vsel %vm1045, 1, 0
    %v1062 = vsel %vm1046, 1, 0
    %v1063 = vsel %vm1047, 1, 0
    %v1064 = vsel %vm1048, 1, 0
    %v1065 = vsel %vm1049, 1, 0
    %v1066 = vsel %vm1050, 1, 0
    %v1067 = vsel %vm1051, 1, 0
    %v1068 = vsel %vm1052, 1, 0
    %v1069 = vsel %vm1053, 1, 0
    %v1070 = vsel %vm1054, 1, 0
    %v1071 = vcvt.s32.f32 %v1055
    %v1072 = vcvt.s32.f32 %v1056
    %v1073 = vcvt.s32.f32 %v1057
    %v1074 = vcvt.s32.f32 %v1058
    %v1075 = vcvt.s32.f32 %v1059
    %v1076 = vcvt.s32.f32 %v1060
    %v1077 = vcvt.s32.f32 %v1061
    %v1078 = vcvt.s32.f32 %v1062
    %v1079 = vcvt.s32.f32 %v1063
    %v1080 = vcvt.s32.f32 %v1064
    %v1081 = vcvt.s32.f32 %v1065
    %v1082 = vcvt.s32.f32 %v1066
    %v1083 = vcvt.s32.f32 %v1067
    %v1084 = vcvt.s32.f32 %v1068
    %v1085 = vcvt.s32.f32 %v1069
    %v1086 = vcvt.s32.f32 %v1070
    %s1087 = scalar_lea.vmem %s6, 64
    %v1088 = vld [vmem:[%s1087] sm:$0xff]
    %v1089 = vld [vmem:[%s1087 + $0x8] sm:$0xff]
    %v1090 = vld [vmem:[%s1087 + $0x10] sm:$0xff]
    %v1091 = vld [vmem:[%s1087 + $0x18] sm:$0xff]
    %v1093 = vsel %vm538, %v1071, 0
    %v1096 = vsel %vm538, %v1072, 0
    %v1099 = vsel %vm538, %v1073, 0
    %v1102 = vsel %vm538, %v1074, 0
    %v1105 = vsel %vm538, %v1075, 0
    %v1108 = vsel %vm538, %v1076, 0
    %v1111 = vsel %vm538, %v1077, 0
    %v1114 = vsel %vm538, %v1078, 0
    %v1117 = vsel %vm538, %v1079, 0
    %v1120 = vsel %vm538, %v1080, 0
    %v1123 = vsel %vm538, %v1081, 0
    %v1126 = vsel %vm538, %v1082, 0
    %v1129 = vsel %vm538, %v1083, 0
    %v1132 = vsel %vm538, %v1084, 0
    %v1135 = vsel %vm538, %v1085, 0
    %v1138 = vsel %vm538, %v1086, 0
    %1140 = vmatprep.subr.mxu0 0.0
    %1141 = vmatpush1.msra.mxu0 0.0
    %1142 = vmatprep.subr.mxu0 0.0
    %1143 = vmatpush1.msra.mxu0 0.0
    %1144 = vmatprep.subr.mxu0 0.0
    %1145 = vmatpush1.msra.mxu0 0.0
    %1146 = vmatprep.subr.mxu0 0.0
    %1147 = vmatpush1.msra.mxu0 0.0
    %1148 = vmatprep.subr.mxu0 0.0
    %1149 = vmatpush1.msra.mxu0 0.0
    %1150 = vmatprep.subr.mxu0 0.0
    %1151 = vmatpush1.msra.mxu0 0.0
    %1152 = vmatprep.subr.mxu0 0.0
    %1153 = vmatpush1.msra.mxu0 0.0
    %1154 = vmatprep.subr.mxu0 0.0
    %1155 = vmatpush1.msra.mxu0 0.0
    %1156 = vmatprep.subr.mxu0 0.0
    %1157 = vmatpush1.msra.mxu0 0.0
    %1158 = vmatprep.subr.mxu0 0.0
    %1159 = vmatpush1.msra.mxu0 0.0
    %1160 = vmatprep.subr.mxu0 0.0
    %1161 = vmatpush1.msra.mxu0 0.0
    %1162 = vmatprep.subr.mxu0 0.0
    %1163 = vmatpush1.msra.mxu0 0.0
    %1164 = vmatprep.subr.mxu0 0.0
    %1165 = vmatpush1.msra.mxu0 %v1091
    %1166 = vmatprep.subr.mxu0 0.0
    %1167 = vmatpush1.msra.mxu0 %v1090
    %1168 = vmatprep.subr.mxu0 0.0
    %1169 = vmatpush1.msra.mxu0 %v1089
    %1170 = vmatprep.subr.mxu0 0.0
    %1171 = vmatpush1.msra.mxu0 %v1088
    %1172 = vmatprep.subr.mxu0 0.0
    %1173 = vmatpush2.msra.mxu0 0.0
    %1174 = vmatprep.subr.mxu0 0.0
    %1175 = vmatpush2.msra.mxu0 0.0
    %1176 = vmatprep.subr.mxu0 0.0
    %1177 = vmatpush2.msra.mxu0 0.0
    %1178 = vmatprep.subr.mxu0 0.0
    %1179 = vmatpush2.msra.mxu0 0.0
    %1180 = vmatprep.subr.mxu0 0.0
    %1181 = vmatpush2.msra.mxu0 0.0
    %1182 = vmatprep.subr.mxu0 0.0
    %1183 = vmatpush2.msra.mxu0 0.0
    %1184 = vmatprep.subr.mxu0 0.0
    %1185 = vmatpush2.msra.mxu0 0.0
    %1186 = vmatprep.subr.mxu0 0.0
    %1187 = vmatpush2.msra.mxu0 0.0
    %1188 = vmatprep.subr.mxu0 0.0
    %1189 = vmatpush2.msra.mxu0 0.0
    %1190 = vmatprep.subr.mxu0 0.0
    %1191 = vmatpush2.msra.mxu0 0.0
    %1192 = vmatprep.subr.mxu0 0.0
    %1193 = vmatpush2.msra.mxu0 0.0
    %1194 = vmatprep.subr.mxu0 0.0
    %1195 = vmatpush2.msra.mxu0 0.0
    %1196 = vmatprep.subr.mxu0 0.0
    %1197 = vmatpush2.msra.mxu0 0.0
    %1198 = vmatprep.subr.mxu0 0.0
    %1199 = vmatpush2.msra.mxu0 0.0
    %1200 = vmatprep.subr.mxu0 0.0
    %1201 = vmatpush2.msra.mxu0 0.0
    %1202 = vmatprep.subr.mxu0 0.0
    %1203 = vmatpush2.msra.mxu0 0.0
    %1204 = vmatprep.mubr.f32.mxu0 0.0
    %1205 = vmatmul.mubr.f32.gmra.mxu0 %v1093
    %v1206 = vpop.f32.mrf.mxu0
    %v1207 = vadd.f32 0.0, %v1206
    %v1208 = vpop.f32.mrf.mxu0
    %1209 = vmatprep.mubr.f32.mxu0 0.0
    %1210 = vmatmul.mubr.f32.gmra.mxu0 %v1096
    %v1211 = vpop.f32.mrf.mxu0
    %v1212 = vadd.f32 0.0, %v1211
    %v1213 = vpop.f32.mrf.mxu0
    %1214 = vmatprep.mubr.f32.mxu0 0.0
    %1215 = vmatmul.mubr.f32.gmra.mxu0 %v1099
    %v1216 = vpop.f32.mrf.mxu0
    %v1217 = vadd.f32 0.0, %v1216
    %v1218 = vpop.f32.mrf.mxu0
    %1219 = vmatprep.mubr.f32.mxu0 0.0
    %1220 = vmatmul.mubr.f32.gmra.mxu0 %v1102
    %v1221 = vpop.f32.mrf.mxu0
    %v1222 = vadd.f32 0.0, %v1221
    %v1223 = vpop.f32.mrf.mxu0
    %1224 = vmatprep.mubr.f32.mxu0 0.0
    %1225 = vmatmul.mubr.f32.gmra.mxu0 %v1105
    %v1226 = vpop.f32.mrf.mxu0
    %v1227 = vadd.f32 0.0, %v1226
    %v1228 = vpop.f32.mrf.mxu0
    %1229 = vmatprep.mubr.f32.mxu0 0.0
    %1230 = vmatmul.mubr.f32.gmra.mxu0 %v1108
    %v1231 = vpop.f32.mrf.mxu0
    %v1232 = vadd.f32 0.0, %v1231
    %v1233 = vpop.f32.mrf.mxu0
    %1234 = vmatprep.mubr.f32.mxu0 0.0
    %1235 = vmatmul.mubr.f32.gmra.mxu0 %v1111
    %v1236 = vpop.f32.mrf.mxu0
    %v1237 = vadd.f32 0.0, %v1236
    %v1238 = vpop.f32.mrf.mxu0
    %1239 = vmatprep.mubr.f32.mxu0 0.0
    %1240 = vmatmul.mubr.f32.gmra.mxu0 %v1114
    %v1241 = vpop.f32.mrf.mxu0
    %v1242 = vadd.f32 0.0, %v1241
    %v1243 = vpop.f32.mrf.mxu0
    %1244 = vmatprep.mubr.f32.mxu0 0.0
    %1245 = vmatmul.mubr.f32.gmra.mxu0 %v1117
    %v1246 = vpop.f32.mrf.mxu0
    %v1247 = vadd.f32 0.0, %v1246
    %v1248 = vpop.f32.mrf.mxu0
    %1249 = vmatprep.mubr.f32.mxu0 0.0
    %1250 = vmatmul.mubr.f32.gmra.mxu0 %v1120
    %v1251 = vpop.f32.mrf.mxu0
    %v1252 = vadd.f32 0.0, %v1251
    %v1253 = vpop.f32.mrf.mxu0
    %1254 = vmatprep.mubr.f32.mxu0 0.0
    %1255 = vmatmul.mubr.f32.gmra.mxu0 %v1123
    %v1256 = vpop.f32.mrf.mxu0
    %v1257 = vadd.f32 0.0, %v1256
    %v1258 = vpop.f32.mrf.mxu0
    %1259 = vmatprep.mubr.f32.mxu0 0.0
    %1260 = vmatmul.mubr.f32.gmra.mxu0 %v1126
    %v1261 = vpop.f32.mrf.mxu0
    %v1262 = vadd.f32 0.0, %v1261
    %v1263 = vpop.f32.mrf.mxu0
    %1264 = vmatprep.mubr.f32.mxu0 0.0
    %1265 = vmatmul.mubr.f32.gmra.mxu0 %v1129
    %v1266 = vpop.f32.mrf.mxu0
    %v1267 = vadd.f32 0.0, %v1266
    %v1268 = vpop.f32.mrf.mxu0
    %1269 = vmatprep.mubr.f32.mxu0 0.0
    %1270 = vmatmul.mubr.f32.gmra.mxu0 %v1132
    %v1271 = vpop.f32.mrf.mxu0
    %v1272 = vadd.f32 0.0, %v1271
    %v1273 = vpop.f32.mrf.mxu0
    %1274 = vmatprep.mubr.f32.mxu0 0.0
    %1275 = vmatmul.mubr.f32.gmra.mxu0 %v1135
    %v1276 = vpop.f32.mrf.mxu0
    %v1277 = vadd.f32 0.0, %v1276
    %v1278 = vpop.f32.mrf.mxu0
    %1279 = vmatprep.mubr.f32.mxu0 0.0
    %1280 = vmatmul.mubr.f32.gmra.mxu0 %v1138
    %v1281 = vpop.f32.mrf.mxu0
    %v1282 = vadd.f32 0.0, %v1281
    %v1283 = vpop.f32.mrf.mxu0
    %1284 = vdwg.mxu0
    %v1285 = vadd.f32 %v847, %v1207
    %v1286 = vadd.f32 %v852, %v1212
    %v1287 = vadd.f32 %v857, %v1217
    %v1288 = vadd.f32 %v862, %v1222
    %v1289 = vadd.f32 %v867, %v1227
    %v1290 = vadd.f32 %v872, %v1232
    %v1291 = vadd.f32 %v877, %v1237
    %v1292 = vadd.f32 %v882, %v1242
    %v1293 = vadd.f32 %v887, %v1247
    %v1294 = vadd.f32 %v892, %v1252
    %v1295 = vadd.f32 %v897, %v1257
    %v1296 = vadd.f32 %v902, %v1262
    %v1297 = vadd.f32 %v907, %v1267
    %v1298 = vadd.f32 %v912, %v1272
    %v1299 = vadd.f32 %v917, %v1277
    %v1300 = vadd.f32 %v922, %v1282
    %v1301 = vlaneseq
    %v1302 = vshrl.u32 %v1301, 7
    %v1303 = vsub.s32 0, %v1302
    %v1304 = vrot.slane %v67, %v1303
    %v1305 = vadd.f32 %v1285, %v1304
    %v1306 = vadd.f32 %v1286, %v1304
    %v1307 = vadd.f32 %v1287, %v1304
    %v1308 = vadd.f32 %v1288, %v1304
    %v1309 = vadd.f32 %v1289, %v1304
    %v1310 = vadd.f32 %v1290, %v1304
    %v1311 = vadd.f32 %v1291, %v1304
    %v1312 = vadd.f32 %v1292, %v1304
    %v1313 = vadd.f32 %v1293, %v1304
    %v1314 = vadd.f32 %v1294, %v1304
    %v1315 = vadd.f32 %v1295, %v1304
    %v1316 = vadd.f32 %v1296, %v1304
    %v1317 = vadd.f32 %v1297, %v1304
    %v1318 = vadd.f32 %v1298, %v1304
    %v1319 = vadd.f32 %v1299, %v1304
    %v1320 = vadd.f32 %v1300, %v1304
    %v1321 = vmax.f32 %v1305, 0.0
    %v1322 = vmax.f32 %v1306, 0.0
    %v1323 = vmax.f32 %v1307, 0.0
    %v1324 = vmax.f32 %v1308, 0.0
    %v1325 = vmax.f32 %v1309, 0.0
    %v1326 = vmax.f32 %v1310, 0.0
    %v1327 = vmax.f32 %v1311, 0.0
    %v1328 = vmax.f32 %v1312, 0.0
    %v1329 = vmax.f32 %v1313, 0.0
    %v1330 = vmax.f32 %v1314, 0.0
    %v1331 = vmax.f32 %v1315, 0.0
    %v1332 = vmax.f32 %v1316, 0.0
    %v1333 = vmax.f32 %v1317, 0.0
    %v1334 = vmax.f32 %v1318, 0.0
    %v1335 = vmax.f32 %v1319, 0.0
    %v1336 = vmax.f32 %v1320, 0.0
    %v1337 = vsel %vm538, %v1321, -inf
    %v1338 = vrot.slane %v1337, 4
    %v1339 = vmax.f32 %v1337, %v1338
    %v1340 = vrot.slane %v1339, 2
    %v1341 = vmax.f32 %v1339, %v1340
    %v1342 = vrot.slane %v1341, 1
    %v1343 = vmax.f32 %v1341, %v1342
    %v1344 = vsel %vm538, %v1322, -inf
    %v1345 = vrot.slane %v1344, 4
    %v1346 = vmax.f32 %v1344, %v1345
    %v1347 = vrot.slane %v1346, 2
    %v1348 = vmax.f32 %v1346, %v1347
    %v1349 = vrot.slane %v1348, 1
    %v1350 = vmax.f32 %v1348, %v1349
    %v1351 = vsel %vm538, %v1323, -inf
    %v1352 = vrot.slane %v1351, 4
    %v1353 = vmax.f32 %v1351, %v1352
    %v1354 = vrot.slane %v1353, 2
    %v1355 = vmax.f32 %v1353, %v1354
    %v1356 = vrot.slane %v1355, 1
    %v1357 = vmax.f32 %v1355, %v1356
    %v1358 = vsel %vm538, %v1324, -inf
    %v1359 = vrot.slane %v1358, 4
    %v1360 = vmax.f32 %v1358, %v1359
    %v1361 = vrot.slane %v1360, 2
    %v1362 = vmax.f32 %v1360, %v1361
    %v1363 = vrot.slane %v1362, 1
    %v1364 = vmax.f32 %v1362, %v1363
    %v1365 = vsel %vm538, %v1325, -inf
    %v1366 = vrot.slane %v1365, 4
    %v1367 = vmax.f32 %v1365, %v1366
    %v1368 = vrot.slane %v1367, 2
    %v1369 = vmax.f32 %v1367, %v1368
    %v1370 = vrot.slane %v1369, 1
    %v1371 = vmax.f32 %v1369, %v1370
    %v1372 = vsel %vm538, %v1326, -inf
    %v1373 = vrot.slane %v1372, 4
    %v1374 = vmax.f32 %v1372, %v1373
    %v1375 = vrot.slane %v1374, 2
    %v1376 = vmax.f32 %v1374, %v1375
    %v1377 = vrot.slane %v1376, 1
    %v1378 = vmax.f32 %v1376, %v1377
    %v1379 = vsel %vm538, %v1327, -inf
    %v1380 = vrot.slane %v1379, 4
    %v1381 = vmax.f32 %v1379, %v1380
    %v1382 = vrot.slane %v1381, 2
    %v1383 = vmax.f32 %v1381, %v1382
    %v1384 = vrot.slane %v1383, 1
    %v1385 = vmax.f32 %v1383, %v1384
    %v1386 = vsel %vm538, %v1328, -inf
    %v1387 = vrot.slane %v1386, 4
    %v1388 = vmax.f32 %v1386, %v1387
    %v1389 = vrot.slane %v1388, 2
    %v1390 = vmax.f32 %v1388, %v1389
    %v1391 = vrot.slane %v1390, 1
    %v1392 = vmax.f32 %v1390, %v1391
    %v1393 = vsel %vm538, %v1329, -inf
    %v1394 = vrot.slane %v1393, 4
    %v1395 = vmax.f32 %v1393, %v1394
    %v1396 = vrot.slane %v1395, 2
    %v1397 = vmax.f32 %v1395, %v1396
    %v1398 = vrot.slane %v1397, 1
    %v1399 = vmax.f32 %v1397, %v1398
    %v1400 = vsel %vm538, %v1330, -inf
    %v1401 = vrot.slane %v1400, 4
    %v1402 = vmax.f32 %v1400, %v1401
    %v1403 = vrot.slane %v1402, 2
    %v1404 = vmax.f32 %v1402, %v1403
    %v1405 = vrot.slane %v1404, 1
    %v1406 = vmax.f32 %v1404, %v1405
    %v1407 = vsel %vm538, %v1331, -inf
    %v1408 = vrot.slane %v1407, 4
    %v1409 = vmax.f32 %v1407, %v1408
    %v1410 = vrot.slane %v1409, 2
    %v1411 = vmax.f32 %v1409, %v1410
    %v1412 = vrot.slane %v1411, 1
    %v1413 = vmax.f32 %v1411, %v1412
    %v1414 = vsel %vm538, %v1332, -inf
    %v1415 = vrot.slane %v1414, 4
    %v1416 = vmax.f32 %v1414, %v1415
    %v1417 = vrot.slane %v1416, 2
    %v1418 = vmax.f32 %v1416, %v1417
    %v1419 = vrot.slane %v1418, 1
    %v1420 = vmax.f32 %v1418, %v1419
    %v1421 = vsel %vm538, %v1333, -inf
    %v1422 = vrot.slane %v1421, 4
    %v1423 = vmax.f32 %v1421, %v1422
    %v1424 = vrot.slane %v1423, 2
    %v1425 = vmax.f32 %v1423, %v1424
    %v1426 = vrot.slane %v1425, 1
    %v1427 = vmax.f32 %v1425, %v1426
    %v1428 = vsel %vm538, %v1334, -inf
    %v1429 = vrot.slane %v1428, 4
    %v1430 = vmax.f32 %v1428, %v1429
    %v1431 = vrot.slane %v1430, 2
    %v1432 = vmax.f32 %v1430, %v1431
    %v1433 = vrot.slane %v1432, 1
    %v1434 = vmax.f32 %v1432, %v1433
    %v1435 = vsel %vm538, %v1335, -inf
    %v1436 = vrot.slane %v1435, 4
    %v1437 = vmax.f32 %v1435, %v1436
    %v1438 = vrot.slane %v1437, 2
    %v1439 = vmax.f32 %v1437, %v1438
    %v1440 = vrot.slane %v1439, 1
    %v1441 = vmax.f32 %v1439, %v1440
    %v1442 = vsel %vm538, %v1336, -inf
    %v1443 = vrot.slane %v1442, 4
    %v1444 = vmax.f32 %v1442, %v1443
    %v1445 = vrot.slane %v1444, 2
    %v1446 = vmax.f32 %v1444, %v1445
    %v1447 = vrot.slane %v1446, 1
    %v1448 = vmax.f32 %v1446, %v1447
    %v1449 = vld [vmem:[%s7] sm:$0xff]
    %v1450 = vld [vmem:[%s7 + $0x8] sm:$0xff]
    %v1451 = vld [vmem:[%s7 + $0x10] sm:$0xff]
    %v1452 = vld [vmem:[%s7 + $0x18] sm:$0xff]
    %v1453 = vld [vmem:[%s8] sm:$0xff]
    %v1454 = vld [vmem:[%s8 + $0x8] sm:$0xff]
    %v1455 = vld [vmem:[%s8 + $0x10] sm:$0xff]
    %v1456 = vld [vmem:[%s8 + $0x18] sm:$0xff]
    %vm1473 = vcmask 1041409
    %v1474 = vsel %vm1473, %v1350, %v1343
    %vm1475 = vcmask 1042434
    %v1476 = vsel %vm1475, %v1357, %v1474
    %vm1477 = vcmask 1043459
    %v1478 = vsel %vm1477, %v1364, %v1476
    %vm1479 = vcmask 1044484
    %v1480 = vsel %vm1479, %v1371, %v1478
    %vm1481 = vcmask 1045509
    %v1482 = vsel %vm1481, %v1378, %v1480
    %vm1483 = vcmask 1046534
    %v1484 = vsel %vm1483, %v1385, %v1482
    %vm1485 = vcmask 1047559
    %v1486 = vsel %vm1485, %v1392, %v1484
    %v1487 = vsel %vm1473, %v1406, %v1399
    %v1488 = vsel %vm1475, %v1413, %v1487
    %v1489 = vsel %vm1477, %v1420, %v1488
    %v1490 = vsel %vm1479, %v1427, %v1489
    %v1491 = vsel %vm1481, %v1434, %v1490
    %v1492 = vsel %vm1483, %v1441, %v1491
    %v1493 = vsel %vm1485, %v1448, %v1492
    %v1494 = vsel %vm538, %v1486, 0
    %v1496 = vsel %vm538, %v1493, 0
    %1498 = vmatprep.subr.mxu0 0.0
    %1499 = vmatpush1.msra.mxu0 0.0
    %1500 = vmatprep.subr.mxu0 0.0
    %1501 = vmatpush1.msra.mxu0 0.0
    %1502 = vmatprep.subr.mxu0 0.0
    %1503 = vmatpush1.msra.mxu0 0.0
    %1504 = vmatprep.subr.mxu0 0.0
    %1505 = vmatpush1.msra.mxu0 0.0
    %1506 = vmatprep.subr.mxu0 0.0
    %1507 = vmatpush1.msra.mxu0 0.0
    %1508 = vmatprep.subr.mxu0 0.0
    %1509 = vmatpush1.msra.mxu0 0.0
    %1510 = vmatprep.subr.mxu0 0.0
    %1511 = vmatpush1.msra.mxu0 0.0
    %1512 = vmatprep.subr.mxu0 0.0
    %1513 = vmatpush1.msra.mxu0 0.0
    %1514 = vmatprep.subr.mxu0 0.0
    %1515 = vmatpush1.msra.mxu0 0.0
    %1516 = vmatprep.subr.mxu0 0.0
    %1517 = vmatpush1.msra.mxu0 0.0
    %1518 = vmatprep.subr.mxu0 0.0
    %1519 = vmatpush1.msra.mxu0 0.0
    %1520 = vmatprep.subr.mxu0 0.0
    %1521 = vmatpush1.msra.mxu0 0.0
    %1522 = vmatprep.subr.mxu0 0.0
    %1523 = vmatpush1.msra.mxu0 %v1456
    %1524 = vmatprep.subr.mxu0 0.0
    %1525 = vmatpush1.msra.mxu0 %v1455
    %1526 = vmatprep.subr.mxu0 0.0
    %1527 = vmatpush1.msra.mxu0 %v1454
    %1528 = vmatprep.subr.mxu0 0.0
    %1529 = vmatpush1.msra.mxu0 %v1453
    %1530 = vmatprep.subr.mxu0 0.0
    %1531 = vmatpush2.msra.mxu0 0.0
    %1532 = vmatprep.subr.mxu0 0.0
    %1533 = vmatpush2.msra.mxu0 0.0
    %1534 = vmatprep.subr.mxu0 0.0
    %1535 = vmatpush2.msra.mxu0 0.0
    %1536 = vmatprep.subr.mxu0 0.0
    %1537 = vmatpush2.msra.mxu0 0.0
    %1538 = vmatprep.subr.mxu0 0.0
    %1539 = vmatpush2.msra.mxu0 0.0
    %1540 = vmatprep.subr.mxu0 0.0
    %1541 = vmatpush2.msra.mxu0 0.0
    %1542 = vmatprep.subr.mxu0 0.0
    %1543 = vmatpush2.msra.mxu0 0.0
    %1544 = vmatprep.subr.mxu0 0.0
    %1545 = vmatpush2.msra.mxu0 0.0
    %1546 = vmatprep.subr.mxu0 0.0
    %1547 = vmatpush2.msra.mxu0 0.0
    %1548 = vmatprep.subr.mxu0 0.0
    %1549 = vmatpush2.msra.mxu0 0.0
    %1550 = vmatprep.subr.mxu0 0.0
    %1551 = vmatpush2.msra.mxu0 0.0
    %1552 = vmatprep.subr.mxu0 0.0
    %1553 = vmatpush2.msra.mxu0 0.0
    %1554 = vmatprep.subr.mxu0 0.0
    %1555 = vmatpush2.msra.mxu0 0.0
    %1556 = vmatprep.subr.mxu0 0.0
    %1557 = vmatpush2.msra.mxu0 0.0
    %1558 = vmatprep.subr.mxu0 0.0
    %1559 = vmatpush2.msra.mxu0 0.0
    %1560 = vmatprep.subr.mxu0 0.0
    %1561 = vmatpush2.msra.mxu0 0.0
    %1562 = vmatprep.mubr.f32.mxu0 0.0
    %1563 = vmatmul.mubr.f32.gmra.mxu0 %v1494
    %v1564 = vpop.f32.mrf.mxu0
    %v1565 = vadd.f32 0.0, %v1564
    %v1566 = vpop.f32.mrf.mxu0
    %1567 = vmatprep.mubr.f32.mxu0 0.0
    %1568 = vmatmul.mubr.f32.gmra.mxu0 %v1496
    %v1569 = vpop.f32.mrf.mxu0
    %v1570 = vadd.f32 0.0, %v1569
    %v1571 = vpop.f32.mrf.mxu0
    %1572 = vdwg.mxu0
    %v1574 = vsel %vm538, %v203, 0
    %v1577 = vsel %vm538, %v204, 0
    %1579 = vmatprep.subr.mxu0 0.0
    %1580 = vmatpush1.msra.mxu0 0.0
    %1581 = vmatprep.subr.mxu0 0.0
    %1582 = vmatpush1.msra.mxu0 0.0
    %1583 = vmatprep.subr.mxu0 0.0
    %1584 = vmatpush1.msra.mxu0 0.0
    %1585 = vmatprep.subr.mxu0 0.0
    %1586 = vmatpush1.msra.mxu0 0.0
    %1587 = vmatprep.subr.mxu0 0.0
    %1588 = vmatpush1.msra.mxu0 0.0
    %1589 = vmatprep.subr.mxu0 0.0
    %1590 = vmatpush1.msra.mxu0 0.0
    %1591 = vmatprep.subr.mxu0 0.0
    %1592 = vmatpush1.msra.mxu0 0.0
    %1593 = vmatprep.subr.mxu0 0.0
    %1594 = vmatpush1.msra.mxu0 0.0
    %1595 = vmatprep.subr.mxu0 0.0
    %1596 = vmatpush1.msra.mxu0 0.0
    %1597 = vmatprep.subr.mxu0 0.0
    %1598 = vmatpush1.msra.mxu0 0.0
    %1599 = vmatprep.subr.mxu0 0.0
    %1600 = vmatpush1.msra.mxu0 0.0
    %1601 = vmatprep.subr.mxu0 0.0
    %1602 = vmatpush1.msra.mxu0 0.0
    %1603 = vmatprep.subr.mxu0 0.0
    %1604 = vmatpush1.msra.mxu0 %v1452
    %1605 = vmatprep.subr.mxu0 0.0
    %1606 = vmatpush1.msra.mxu0 %v1451
    %1607 = vmatprep.subr.mxu0 0.0
    %1608 = vmatpush1.msra.mxu0 %v1450
    %1609 = vmatprep.subr.mxu0 0.0
    %1610 = vmatpush1.msra.mxu0 %v1449
    %1611 = vmatprep.subr.mxu0 0.0
    %1612 = vmatpush2.msra.mxu0 0.0
    %1613 = vmatprep.subr.mxu0 0.0
    %1614 = vmatpush2.msra.mxu0 0.0
    %1615 = vmatprep.subr.mxu0 0.0
    %1616 = vmatpush2.msra.mxu0 0.0
    %1617 = vmatprep.subr.mxu0 0.0
    %1618 = vmatpush2.msra.mxu0 0.0
    %1619 = vmatprep.subr.mxu0 0.0
    %1620 = vmatpush2.msra.mxu0 0.0
    %1621 = vmatprep.subr.mxu0 0.0
    %1622 = vmatpush2.msra.mxu0 0.0
    %1623 = vmatprep.subr.mxu0 0.0
    %1624 = vmatpush2.msra.mxu0 0.0
    %1625 = vmatprep.subr.mxu0 0.0
    %1626 = vmatpush2.msra.mxu0 0.0
    %1627 = vmatprep.subr.mxu0 0.0
    %1628 = vmatpush2.msra.mxu0 0.0
    %1629 = vmatprep.subr.mxu0 0.0
    %1630 = vmatpush2.msra.mxu0 0.0
    %1631 = vmatprep.subr.mxu0 0.0
    %1632 = vmatpush2.msra.mxu0 0.0
    %1633 = vmatprep.subr.mxu0 0.0
    %1634 = vmatpush2.msra.mxu0 0.0
    %1635 = vmatprep.subr.mxu0 0.0
    %1636 = vmatpush2.msra.mxu0 0.0
    %1637 = vmatprep.subr.mxu0 0.0
    %1638 = vmatpush2.msra.mxu0 0.0
    %1639 = vmatprep.subr.mxu0 0.0
    %1640 = vmatpush2.msra.mxu0 0.0
    %1641 = vmatprep.subr.mxu0 0.0
    %1642 = vmatpush2.msra.mxu0 0.0
    %1643 = vmatprep.mubr.f32.mxu0 0.0
    %1644 = vmatmul.mubr.f32.gmra.mxu0 %v1574
    %v1645 = vpop.f32.mrf.mxu0
    %v1646 = vadd.f32 %v1565, %v1645
    %v1647 = vpop.f32.mrf.mxu0
    %1648 = vmatprep.mubr.f32.mxu0 0.0
    %1649 = vmatmul.mubr.f32.gmra.mxu0 %v1577
    %v1650 = vpop.f32.mrf.mxu0
    %v1651 = vadd.f32 %v1570, %v1650
    %v1652 = vpop.f32.mrf.mxu0
    %1653 = vdwg.mxu0
    %v1654 = vlaneseq
    %v1655 = vshrl.u32 %v1654, 7
    %v1656 = vsub.s32 0, %v1655
    %v1657 = vrot.slane %v68, %v1656
    %v1658 = vadd.f32 %v1646, %v1657
    %v1659 = vadd.f32 %v1651, %v1657
    %v1660 = vld [vmem:[#allocation2] sm:$0xff]
    %v1661 = vld [vmem:[#allocation2 + $0x8] sm:$0xff]
    %v1662 = vld [vmem:[#allocation5] sm:$0xff]
    %v1663 = vld [vmem:[#allocation5 + $0x8] sm:$0xff]
    %vm1664 = vcmask 130048
    %v1666 = vsel %vm1664, %v1660, 0
    %v1669 = vsel %vm1664, %v1661, 0
    %1671 = vmatprep.subr.mxu0 0.0
    %1672 = vmatpush1.msra.mxu0 0.0
    %1673 = vmatprep.subr.mxu0 0.0
    %1674 = vmatpush1.msra.mxu0 0.0
    %1675 = vmatprep.subr.mxu0 0.0
    %1676 = vmatpush1.msra.mxu0 0.0
    %1677 = vmatprep.subr.mxu0 0.0
    %1678 = vmatpush1.msra.mxu0 0.0
    %1679 = vmatprep.subr.mxu0 0.0
    %1680 = vmatpush1.msra.mxu0 0.0
    %1681 = vmatprep.subr.mxu0 0.0
    %1682 = vmatpush1.msra.mxu0 0.0
    %1683 = vmatprep.subr.mxu0 0.0
    %1684 = vmatpush1.msra.mxu0 0.0
    %1685 = vmatprep.subr.mxu0 0.0
    %1686 = vmatpush1.msra.mxu0 0.0
    %1687 = vmatprep.subr.mxu0 0.0
    %1688 = vmatpush1.msra.mxu0 0.0
    %1689 = vmatprep.subr.mxu0 0.0
    %1690 = vmatpush1.msra.mxu0 0.0
    %1691 = vmatprep.subr.mxu0 0.0
    %1692 = vmatpush1.msra.mxu0 0.0
    %1693 = vmatprep.subr.mxu0 0.0
    %1694 = vmatpush1.msra.mxu0 0.0
    %1695 = vmatprep.subr.mxu0 0.0
    %1696 = vmatpush1.msra.mxu0 0.0
    %1697 = vmatprep.subr.mxu0 0.0
    %1698 = vmatpush1.msra.mxu0 0.0
    %1699 = vmatprep.subr.mxu0 0.0
    %1700 = vmatpush1.msra.mxu0 %v1663
    %1701 = vmatprep.subr.mxu0 0.0
    %1702 = vmatpush1.msra.mxu0 %v1662
    %1703 = vmatprep.subr.mxu0 0.0
    %1704 = vmatpush2.msra.mxu0 0.0
    %1705 = vmatprep.subr.mxu0 0.0
    %1706 = vmatpush2.msra.mxu0 0.0
    %1707 = vmatprep.subr.mxu0 0.0
    %1708 = vmatpush2.msra.mxu0 0.0
    %1709 = vmatprep.subr.mxu0 0.0
    %1710 = vmatpush2.msra.mxu0 0.0
    %1711 = vmatprep.subr.mxu0 0.0
    %1712 = vmatpush2.msra.mxu0 0.0
    %1713 = vmatprep.subr.mxu0 0.0
    %1714 = vmatpush2.msra.mxu0 0.0
    %1715 = vmatprep.subr.mxu0 0.0
    %1716 = vmatpush2.msra.mxu0 0.0
    %1717 = vmatprep.subr.mxu0 0.0
    %1718 = vmatpush2.msra.mxu0 0.0
    %1719 = vmatprep.subr.mxu0 0.0
    %1720 = vmatpush2.msra.mxu0 0.0
    %1721 = vmatprep.subr.mxu0 0.0
    %1722 = vmatpush2.msra.mxu0 0.0
    %1723 = vmatprep.subr.mxu0 0.0
    %1724 = vmatpush2.msra.mxu0 0.0
    %1725 = vmatprep.subr.mxu0 0.0
    %1726 = vmatpush2.msra.mxu0 0.0
    %1727 = vmatprep.subr.mxu0 0.0
    %1728 = vmatpush2.msra.mxu0 0.0
    %1729 = vmatprep.subr.mxu0 0.0
    %1730 = vmatpush2.msra.mxu0 0.0
    %1731 = vmatprep.subr.mxu0 0.0
    %1732 = vmatpush2.msra.mxu0 0.0
    %1733 = vmatprep.subr.mxu0 0.0
    %1734 = vmatpush2.msra.mxu0 0.0
    %1735 = vmatprep.mubr.f32.mxu0 0.0
    %1736 = vmatmul.mubr.f32.gmra.mxu0 %v1666
    %v1737 = vpop.f32.mrf.mxu0
    %v1738 = vadd.f32 0.0, %v1737
    %v1739 = vpop.f32.mrf.mxu0
    %1740 = vmatprep.mubr.f32.mxu0 0.0
    %1741 = vmatmul.mubr.f32.gmra.mxu0 %v1669
    %v1742 = vpop.f32.mrf.mxu0
    %v1743 = vadd.f32 0.0, %v1742
    %v1744 = vpop.f32.mrf.mxu0
    %1745 = vdwg.mxu0
    %v1746 = vadd.f32 %v1658, %v1738
    %v1747 = vadd.f32 %v1659, %v1743
    %v1748 = vlaneseq
    %v1749 = vshrl.u32 %v1748, 7
    %v1750 = vsub.s32 0, %v1749
    %v1751 = vrot.slane %v69, %v1750
    %v1752 = vadd.f32 %v1746, %v1751
    %v1753 = vadd.f32 %v1747, %v1751
    %v1754 = vsel %vm538, %v1752, 0.0
    %1755 = vadd.xlane.f32.xlu0 %v1754
    %v1756 = vpop.xlane.xlu0 %1755
    %v1757 = vsel %vm538, %v1753, 0.0
    %1758 = vadd.xlane.f32.xlu0 %v1757
    %v1759 = vpop.xlane.xlu0 %1758
    %v1760 = vrcp.pop 32.0
    %v1761 = vmul.f32 %v1756, %v1760
    %v1762 = vmul.f32 %v1759, %v1760
    %v1763 = vmul.f32 %v1752, %v1752
    %v1764 = vmul.f32 %v1753, %v1753
    %v1765 = vsel %vm538, %v1763, 0.0
    %1766 = vadd.xlane.f32.xlu0 %v1765
    %v1767 = vpop.xlane.xlu0 %1766
    %v1768 = vsel %vm538, %v1764, 0.0
    %1769 = vadd.xlane.f32.xlu0 %v1768
    %v1770 = vpop.xlane.xlu0 %1769
    %v1771 = vmul.f32 %v1767, %v1760
    %v1772 = vmul.f32 %v1770, %v1760
    %v1773 = vmul.f32 %v1761, %v1761
    %v1774 = vmul.f32 %v1762, %v1762
    %v1775 = vsub.f32 %v1771, %v1773
    %v1776 = vsub.f32 %v1772, %v1774
    %v1777 = vsub.f32 %v1752, %v1761
    %v1778 = vsub.f32 %v1753, %v1762
    %v1779 = vadd.f32 %v1775, 1e-12
    %v1780 = vadd.f32 %v1776, 1e-12
    %v1781 = vrsqrt.pop %v1779
    %v1782 = vrsqrt.pop %v1780
    %v1783 = vmul.f32 %v1777, %v1781
    %v1784 = vmul.f32 %v1778, %v1782
    %v1785 = vlaneseq
    %v1786 = vshrl.u32 %v1785, 7
    %v1787 = vsub.s32 0, %v1786
    %v1788 = vrot.slane %v70, %v1787
    %v1789 = vmul.f32 %v1783, %v1788
    %v1790 = vmul.f32 %v1784, %v1788
    %v1791 = vlaneseq
    %v1792 = vshrl.u32 %v1791, 7
    %v1793 = vsub.s32 0, %v1792
    %v1794 = vrot.slane %v71, %v1793
    %v1795 = vadd.f32 %v1789, %v1794
    %v1796 = vadd.f32 %v1790, %v1794
    %1797 = vst.msk [vmem:[#allocation7] sm:$0xff] %vm538, %v1795
    %1798 = vst.msk [vmem:[#allocation7 + $0x8] sm:$0xff] %vm538, %v1796
    // Predicated region
    $region54: #{tpu_custom_call.1} parent=1 // pred_check
      _
    $region55: #{tpu_custom_call.1} parent=1 // pred_check_branch
      %1800 = sbr.rel (0) target = $region57
    $region56: #{tpu_custom_call.1} parent=1 // pred_region
      %s1802 = ssub.s32 256, 256
      %1803 = vsyncadd [#allocation4], %s1802
      %s1804 = sshll.u32 [#allocation7], 4
      %s1805 = int_to_ptr.vmem [resolvable:$true] %s1804
      %1810 = dma.vmem_to_hbm [thread:$0]  %s1805, 256, %s11, [#allocation4], 128, 128, 8
    $region57: #{tpu_custom_call.1} parent=1 // pred_fallthru
      _
    // Predicated region
    $region58: #{tpu_custom_call.1} parent=1 // pred_check
      _
    $region59: #{tpu_custom_call.1} parent=1 // pred_check_branch
      %1812 = sbr.rel (0) target = $region61
    $region60: #{tpu_custom_call.1} parent=1 // pred_region
      %1813 = dma.done [#allocation4], 256
    $region61: #{tpu_custom_call.1} parent=1 // pred_fallthru
      _
    %1814 = vsyncpa [#allocation3], 1
    %1815 = vsyncpa [#allocation6], 1
    %1816 = vsyncpa [#allocation4], 1

</llo_original>
